<compile_context>
chip_gen: v6e
topology: v6e:2x2x1
jax: 0.10.0
libtpu: 0.0.40
codegen_flags: <defaults>
</compile_context>

<pallas_src>
import math

import jax
import jax.numpy as jnp
import numpy as np
from jax import lax
from jax.experimental import pallas as pl
from jax.experimental.pallas import tpu as pltpu

# ---- small, BrahmaConfig-consistent dimensions ------------------------------
B, S = 2, 8          # batch, seq
H = 32               # hidden_size
NH = 4               # num_attention_heads
NKV = 2              # num_key_value_heads
HD = H // NH         # head_dim = 8
HD2 = HD // 2        # rotary pair count per head = 4
KV_REP = NH // NKV   # kv_repeat = 2
T = B * S            # flattened rows = 16

# fused-weight column layout: [q(32) | k(16) | v(16) | q_swapped(32) | k_swapped(16)]
QW, KW, VW = NH * HD, NKV * HD, NKV * HD
OFF_Q, OFF_K, OFF_V = 0, QW, QW + KW
OFF_QS, OFF_KS = QW + KW + VW, QW + KW + VW + QW
WBIG = OFF_KS + KW                     # 112

# packed rope-table column layout: [Cq(32) | Sq(32) | Ck(16) | Sk(16)]
R_CQ, R_SQ, R_CK, R_SK = 0, QW, 2 * QW, 2 * QW + KW
RW = 2 * QW + 2 * KW                   # 96


# ---- Pallas kernel: single invocation, batch folded into rows ---------------
def _brahma_attn_kernel(x_ref, rope_ref, mask_ref, wbig_ref, wo_ref,
                        o_ref, attn_scr):
    x = x_ref[...]                      # (T, H)   bf16
    rope = rope_ref[...]                # (T, RW)  f32
    mask = mask_ref[...]                # (S, S)   f32 additive mask

    # One fused projection on the MXU: [q | k | v | q_swapped | k_swapped].
    qkv = jnp.dot(x, wbig_ref[...], preferred_element_type=jnp.float32)  # (T, WBIG)

    q = qkv[:, OFF_Q:OFF_Q + QW]        # (T, 32)  per-head [even | odd] layout
    k = qkv[:, OFF_K:OFF_K + KW]        # (T, 16)
    v = qkv[:, OFF_V:OFF_V + VW]        # (T, 16)  original layout
    q_sw = qkv[:, OFF_QS:OFF_QS + QW]   # per-head [odd | even] layout
    k_sw = qkv[:, OFF_KS:OFF_KS + KW]

    # Vectorized RoPE across all heads and batch rows (full-width VPU FMAs).
    # Cq/Sq already carry the 1/sqrt(HD) score scale (folded wrapper-side).
    q_rot = q * rope[:, R_CQ:R_CQ + QW] + q_sw * rope[:, R_SQ:R_SQ + QW]
    k_rot = k * rope[:, R_CK:R_CK + KW] + k_sw * rope[:, R_SK:R_SK + KW]

    dn = (((1,), (1,)), ((), ()))       # contract last dims, no batch dims

    # Heads and batches are few and tiny -> unrolled python loops.
    for b in range(B):
        r0 = b * S
        for h in range(NH):
            kvh = h // KV_REP                                   # GQA mapping
            qh = q_rot[r0:r0 + S, h * HD:(h + 1) * HD]          # (S, HD)
            kh = k_rot[r0:r0 + S, kvh * HD:(kvh + 1) * HD]      # (S, HD)
            vh = v[r0:r0 + S, kvh * HD:(kvh + 1) * HD]          # (S, HD)

            # One rotated dot per head (no .T: contract last dims directly).
            s = lax.dot_general(qh, kh, dn,
                                preferred_element_type=jnp.float32) + mask
            m = jnp.max(s, axis=-1, keepdims=True)
            p = jnp.exp(s - m)
            p = p * pl.reciprocal(jnp.sum(p, axis=-1, keepdims=True), approx=True)

            attn_scr[r0:r0 + S, h * HD:(h + 1) * HD] = jnp.dot(
                p, vh, preferred_element_type=jnp.float32)

    # Single fused output projection.
    o_ref[...] = jnp.dot(attn_scr[...].astype(jnp.bfloat16), wo_ref[...],
                         preferred_element_type=jnp.float32)


def brahma_attention(x_flat, rope, mask, w_big, wo_t):
    """x_flat:(T,H) bf16; rope:(T,RW) f32; mask:(S,S); w_big:(H,WBIG) bf16;
    wo_t:(NH*HD,H) bf16.  Returns (B,S,H) f32."""
    out = pl.pallas_call(
        _brahma_attn_kernel,
        out_shape=jax.ShapeDtypeStruct((T, H), jnp.float32),
        grid=(1,),
        in_specs=[
            pl.BlockSpec((T, H), lambda i: (0, 0)),
            pl.BlockSpec((T, RW), lambda i: (0, 0)),
            pl.BlockSpec((S, S), lambda i: (0, 0)),
            pl.BlockSpec((H, WBIG), lambda i: (0, 0)),
            pl.BlockSpec((NH * HD, H), lambda i: (0, 0)),
        ],
        out_specs=pl.BlockSpec((T, H), lambda i: (0, 0)),
        scratch_shapes=[pltpu.VMEM((T, NH * HD), jnp.float32)],
        compiler_params=pltpu.CompilerParams(
            dimension_semantics=("arbitrary",)),
    )(x_flat, rope, mask, w_big, wo_t)
    return out.reshape(B, S, H)


# ---- parameter setup (glue, plain JAX/numpy) ---------------------------------
def _perm_even_odd(n_heads):
    """Per head: [dims 0,2,4,... | dims 1,3,5,...]."""
    idx = []
    for h in range(n_heads):
        base = h * HD
        idx.extend((base + 2 * np.arange(HD2)).tolist())
        idx.extend((base + 2 * np.arange(HD2) + 1).tolist())
    return np.asarray(idx, np.int32)


def _perm_odd_even(n_heads):
    """Per head: [dims 1,3,5,... | dims 0,2,4,...]  (swapped companion)."""
    idx = []
    for h in range(n_heads):
        base = h * HD
        idx.extend((base + 2 * np.arange(HD2) + 1).tolist())
        idx.extend((base + 2 * np.arange(HD2)).tolist())
    return np.asarray(idx, np.int32)


def _rope_tables(seq_len, head_dim, theta=10000.0):
    inv_freq = 1.0 / (theta ** (np.arange(0, head_dim, 2, dtype=np.float64) / head_dim))
    ang = np.outer(np.arange(seq_len, dtype=np.float64), inv_freq)   # (S, HD2)
    return np.cos(ang), np.sin(ang)


def _pack_rope(cos, sin):
    """Pack cos/sin into one (T, RW) table matching the per-head [even|odd] layout.

    q tables also fold in the 1/sqrt(HD) attention scale.
    q_rot = q * Cq + q_swapped * Sq  reproduces the standard rotation."""
    scale = 1.0 / math.sqrt(HD)
    ch = np.concatenate([cos, cos], axis=1)      # (S, HD)  [cos | cos]
    sh = np.concatenate([-sin, sin], axis=1)     # (S, HD)  [-sin | +sin]
    Cq = np.tile(ch, (1, NH)) * scale
    Sq = np.tile(sh, (1, NH)) * scale
    Ck = np.tile(ch, (1, NKV))
    Sk = np.tile(sh, (1, NKV))
    packed = np.concatenate([Cq, Sq, Ck, Sk], axis=1)     # (S, RW)
    return jnp.asarray(np.tile(packed, (B, 1)), jnp.float32)   # (T, RW)


def _fuse_weights(Wq, Wk, Wv):
    """Build the fused (H, WBIG) projection weight in bf16 (MXU operand)."""
    wq_t = jnp.transpose(Wq)     # (H, NH*HD)
    wk_t = jnp.transpose(Wk)     # (H, NKV*HD)
    wv_t = jnp.transpose(Wv)
    pq, pk = _perm_even_odd(NH), _perm_even_odd(NKV)
    sq, sk = _perm_odd_even(NH), _perm_odd_even(NKV)
    w_big = jnp.concatenate(
        [wq_t[:, pq], wk_t[:, pk], wv_t, wq_t[:, sq], wk_t[:, sk]], axis=1)
    return w_big.astype(jnp.bfloat16)


# ---- pure-JAX reference (mirrors the PyTorch math) ---------------------------
def _reference(x, cos, sin, mask, Wq, Wk, Wv, Wo):
    hp = lax.Precision.HIGHEST
    q = jnp.einsum('bsh,oh->bso', x, Wq, precision=hp).reshape(B, S, NH, HD)
    k = jnp.einsum('bsh,oh->bso', x, Wk, precision=hp).reshape(B, S, NKV, HD)
    v = jnp.einsum('bsh,oh->bso', x, Wv, precision=hp).reshape(B, S, NKV, HD)

    def rope(t):  # (B, S, nh, HD), interleaved even/odd pairs
        te, to = t[..., 0::2], t[..., 1::2]
        c = cos[None, :, None, :]
        s = sin[None, :, None, :]
        re = te * c - to * s
        im = te * s + to * c
        return jnp.stack([re, im], axis=-1).reshape(t.shape)

    q, k = rope(q), rope(k)
    k = jnp.repeat(k, KV_REP, axis=2)
    v = jnp.repeat(v, KV_REP, axis=2)
    scores = jnp.einsum('bqhd,bkhd->bhqk', q, k, precision=hp) / math.sqrt(HD)
    scores = scores + mask[None, None]
    p = jax.nn.softmax(scores.astype(jnp.float32), axis=-1)
    out = jnp.einsum('bhqk,bkhd->bqhd', p, v, precision=hp).reshape(B, S, NH * HD)
    return jnp.einsum('bsd,hd->bsh', out, Wo, precision=hp)


if __name__ == "__main__":
    key = jax.random.PRNGKey(0)
    kx, kq, kk, kv, ko = jax.random.split(key, 5)

    x = jax.random.normal(kx, (B, S, H), jnp.float32)
    # nn.Linear weights, torch layout (out_features, in_features), std=0.02.
    Wq = jax.random.normal(kq, (NH * HD, H), jnp.float32) * 0.02
    Wk = jax.random.normal(kk, (NKV * HD, H), jnp.float32) * 0.02
    Wv = jax.random.normal(kv, (NKV * HD, H), jnp.float32) * 0.02
    Wo = jax.random.normal(ko, (H, NH * HD), jnp.float32) * 0.02

    cos_np, sin_np = _rope_tables(S, HD)
    # causal additive attention mask (typical usage of `attention_mask`).
    causal = np.tril(np.ones((S, S), dtype=bool))
    mask = jnp.where(jnp.asarray(causal), 0.0, -1e9).astype(jnp.float32)

    # Pre-packed / fused kernel operands.
    rope = _pack_rope(cos_np, sin_np)
    w_big = _fuse_weights(Wq, Wk, Wv)
    wo_t = jnp.transpose(Wo).astype(jnp.bfloat16)
    x_flat = x.reshape(T, H).astype(jnp.bfloat16)

    out = jax.block_until_ready(brahma_attention(x_flat, rope, mask, w_big, wo_t))

    cos = jnp.asarray(cos_np, jnp.float32)
    sin = jnp.asarray(sin_np, jnp.float32)
    ref = jax.block_until_ready(_reference(x, cos, sin, mask, Wq, Wk, Wv, Wo))
    np.testing.assert_allclose(np.asarray(out), np.asarray(ref), rtol=2e-2, atol=2e-2)

    print("KERNEL_OK")
</pallas_src>

<mosaic_0001>
module attributes {stable_mosaic.version = 11 : i64} {
  func.func @_brahma_attn_kernel(%arg0: i32, %arg1: memref<16x32xbf16, #tpu.memory_space<vmem>>, %arg2: memref<16x96xf32, #tpu.memory_space<vmem>>, %arg3: memref<8x8xf32, #tpu.memory_space<vmem>>, %arg4: memref<32x112xbf16, #tpu.memory_space<vmem>>, %arg5: memref<32x32xbf16, #tpu.memory_space<vmem>>, %arg6: memref<16x32xf32, #tpu.memory_space<vmem>>, %arg7: memref<16x32xf32, #tpu.memory_space<vmem>>) attributes {dimension_semantics = [#tpu.dimension_semantics<arbitrary>], iteration_bounds = array<i64: 1>, scalar_prefetch = 0 : i64, scratch_operands = 1 : i64, tpu.core_type = #tpu.core_type<tc>, window_params = [{pipeline_mode = #tpu.pipeline_mode<synchronous>, transform_indices = @transform_0, window_bounds = array<i64: 16, 32>}, {pipeline_mode = #tpu.pipeline_mode<synchronous>, transform_indices = @transform_1, window_bounds = array<i64: 16, 96>}, {pipeline_mode = #tpu.pipeline_mode<synchronous>, transform_indices = @transform_2, window_bounds = array<i64: 8, 8>}, {pipeline_mode = #tpu.pipeline_mode<synchronous>, transform_indices = @transform_3, window_bounds = array<i64: 32, 112>}, {pipeline_mode = #tpu.pipeline_mode<synchronous>, transform_indices = @transform_4, window_bounds = array<i64: 32, 32>}, {pipeline_mode = #tpu.pipeline_mode<synchronous>, transform_indices = @transform_5, window_bounds = array<i64: 16, 32>}]} {
    %c0 = arith.constant 0 : index
    %c0_0 = arith.constant 0 : index
    %0 = vector.load %arg1[%c0, %c0_0] : memref<16x32xbf16, #tpu.memory_space<vmem>>, vector<16x32xbf16>
    %c0_1 = arith.constant 0 : index
    %c0_2 = arith.constant 0 : index
    %1 = vector.load %arg2[%c0_1, %c0_2] : memref<16x96xf32, #tpu.memory_space<vmem>>, vector<16x96xf32>
    %c0_3 = arith.constant 0 : index
    %c0_4 = arith.constant 0 : index
    %2 = vector.load %arg3[%c0_3, %c0_4] : memref<8x8xf32, #tpu.memory_space<vmem>>, vector<8x8xf32>
    %c0_5 = arith.constant 0 : index
    %c0_6 = arith.constant 0 : index
    %3 = vector.load %arg4[%c0_5, %c0_6] : memref<32x112xbf16, #tpu.memory_space<vmem>>, vector<32x112xbf16>
    %cst = arith.constant dense<0.000000e+00> : vector<16x112xf32>
    %4 = tpu.matmul %0, %3, %cst {dimension_numbers = #tpu.dot_dimension_numbers<[1], [0], [0], [1], [0, 0, 1, 1], [], []>} : vector<16x32xbf16>, vector<32x112xbf16>, vector<16x112xf32> -> vector<16x112xf32>
    %5 = vector.extract_strided_slice %4 {offsets = [0, 0], sizes = [16, 32], strides = [1, 1]} : vector<16x112xf32> to vector<16x32xf32>
    %6 = vector.extract_strided_slice %4 {offsets = [0, 32], sizes = [16, 16], strides = [1, 1]} : vector<16x112xf32> to vector<16x16xf32>
    %7 = vector.extract_strided_slice %4 {offsets = [0, 48], sizes = [16, 16], strides = [1, 1]} : vector<16x112xf32> to vector<16x16xf32>
    %8 = vector.extract_strided_slice %4 {offsets = [0, 64], sizes = [16, 32], strides = [1, 1]} : vector<16x112xf32> to vector<16x32xf32>
    %9 = vector.extract_strided_slice %4 {offsets = [0, 96], sizes = [16, 16], strides = [1, 1]} : vector<16x112xf32> to vector<16x16xf32>
    %10 = vector.extract_strided_slice %1 {offsets = [0, 0], sizes = [16, 32], strides = [1, 1]} : vector<16x96xf32> to vector<16x32xf32>
    %11 = arith.mulf %5, %10 : vector<16x32xf32>
    %12 = vector.extract_strided_slice %1 {offsets = [0, 32], sizes = [16, 32], strides = [1, 1]} : vector<16x96xf32> to vector<16x32xf32>
    %13 = arith.mulf %8, %12 : vector<16x32xf32>
    %14 = arith.addf %11, %13 : vector<16x32xf32>
    %15 = vector.extract_strided_slice %1 {offsets = [0, 64], sizes = [16, 16], strides = [1, 1]} : vector<16x96xf32> to vector<16x16xf32>
    %16 = arith.mulf %6, %15 : vector<16x16xf32>
    %17 = vector.extract_strided_slice %1 {offsets = [0, 80], sizes = [16, 16], strides = [1, 1]} : vector<16x96xf32> to vector<16x16xf32>
    %18 = arith.mulf %9, %17 : vector<16x16xf32>
    %19 = arith.addf %16, %18 : vector<16x16xf32>
    %20 = vector.extract_strided_slice %14 {offsets = [0, 0], sizes = [8, 8], strides = [1, 1]} : vector<16x32xf32> to vector<8x8xf32>
    %21 = vector.extract_strided_slice %19 {offsets = [0, 0], sizes = [8, 8], strides = [1, 1]} : vector<16x16xf32> to vector<8x8xf32>
    %22 = vector.extract_strided_slice %7 {offsets = [0, 0], sizes = [8, 8], strides = [1, 1]} : vector<16x16xf32> to vector<8x8xf32>
    %cst_7 = arith.constant dense<0.000000e+00> : vector<8x8xf32>
    %23 = tpu.matmul %20, %21, %cst_7 {dimension_numbers = #tpu.dot_dimension_numbers<[1], [1], [0], [0], [0, 0, 1, 0], [], []>} : vector<8x8xf32>, vector<8x8xf32>, vector<8x8xf32> -> vector<8x8xf32>
    %24 = arith.addf %23, %2 : vector<8x8xf32>
    %cst_8 = arith.constant dense<0xFF800000> : vector<8xf32>
    %25 = vector.multi_reduction <maximumf>, %24, %cst_8 [1] : vector<8x8xf32> to vector<8xf32>
    %26 = vector.shape_cast %25 : vector<8xf32> to vector<8x1xf32>
    %27 = vector.broadcast %26 : vector<8x1xf32> to vector<8x8xf32>
    %28 = arith.subf %24, %27 : vector<8x8xf32>
    %29 = math.exp %28 : vector<8x8xf32>
    %cst_9 = arith.constant dense<0.000000e+00> : vector<8xf32>
    %30 = vector.multi_reduction <add>, %29, %cst_9 [1] : vector<8x8xf32> to vector<8xf32>
    %31 = vector.shape_cast %30 : vector<8xf32> to vector<8x1xf32>
    %32 = tpu.reciprocal %31 {approx = true} : vector<8x1xf32> -> vector<8x1xf32>
    %33 = vector.broadcast %32 : vector<8x1xf32> to vector<8x8xf32>
    %34 = arith.mulf %29, %33 : vector<8x8xf32>
    %cst_10 = arith.constant dense<0.000000e+00> : vector<8x8xf32>
    %35 = tpu.matmul %34, %22, %cst_10 {dimension_numbers = #tpu.dot_dimension_numbers<[1], [0], [0], [1], [0, 0, 1, 1], [], []>} : vector<8x8xf32>, vector<8x8xf32>, vector<8x8xf32> -> vector<8x8xf32>
    %c0_11 = arith.constant 0 : index
    %c0_12 = arith.constant 0 : index
    %36 = vector.load %arg7[%c0_11, %c0_12] : memref<16x32xf32, #tpu.memory_space<vmem>>, vector<8x8xf32>
    tpu.vector_store %arg7[%c0_11, %c0_12], %35 {strides = array<i32>} : memref<16x32xf32, #tpu.memory_space<vmem>>, vector<8x8xf32>,
    %37 = vector.extract_strided_slice %14 {offsets = [0, 8], sizes = [8, 8], strides = [1, 1]} : vector<16x32xf32> to vector<8x8xf32>
    %38 = vector.extract_strided_slice %19 {offsets = [0, 0], sizes = [8, 8], strides = [1, 1]} : vector<16x16xf32> to vector<8x8xf32>
    %39 = vector.extract_strided_slice %7 {offsets = [0, 0], sizes = [8, 8], strides = [1, 1]} : vector<16x16xf32> to vector<8x8xf32>
    %cst_13 = arith.constant dense<0.000000e+00> : vector<8x8xf32>
    %40 = tpu.matmul %37, %38, %cst_13 {dimension_numbers = #tpu.dot_dimension_numbers<[1], [1], [0], [0], [0, 0, 1, 0], [], []>} : vector<8x8xf32>, vector<8x8xf32>, vector<8x8xf32> -> vector<8x8xf32>
    %41 = arith.addf %40, %2 : vector<8x8xf32>
    %cst_14 = arith.constant dense<0xFF800000> : vector<8xf32>
    %42 = vector.multi_reduction <maximumf>, %41, %cst_14 [1] : vector<8x8xf32> to vector<8xf32>
    %43 = vector.shape_cast %42 : vector<8xf32> to vector<8x1xf32>
    %44 = vector.broadcast %43 : vector<8x1xf32> to vector<8x8xf32>
    %45 = arith.subf %41, %44 : vector<8x8xf32>
    %46 = math.exp %45 : vector<8x8xf32>
    %cst_15 = arith.constant dense<0.000000e+00> : vector<8xf32>
    %47 = vector.multi_reduction <add>, %46, %cst_15 [1] : vector<8x8xf32> to vector<8xf32>
    %48 = vector.shape_cast %47 : vector<8xf32> to vector<8x1xf32>
    %49 = tpu.reciprocal %48 {approx = true} : vector<8x1xf32> -> vector<8x1xf32>
    %50 = vector.broadcast %49 : vector<8x1xf32> to vector<8x8xf32>
    %51 = arith.mulf %46, %50 : vector<8x8xf32>
    %cst_16 = arith.constant dense<0.000000e+00> : vector<8x8xf32>
    %52 = tpu.matmul %51, %39, %cst_16 {dimension_numbers = #tpu.dot_dimension_numbers<[1], [0], [0], [1], [0, 0, 1, 1], [], []>} : vector<8x8xf32>, vector<8x8xf32>, vector<8x8xf32> -> vector<8x8xf32>
    %c0_17 = arith.constant 0 : index
    %c8 = arith.constant 8 : index
    %53 = vector.load %arg7[%c0_17, %c8] : memref<16x32xf32, #tpu.memory_space<vmem>>, vector<8x8xf32>
    tpu.vector_store %arg7[%c0_17, %c8], %52 {strides = array<i32>} : memref<16x32xf32, #tpu.memory_space<vmem>>, vector<8x8xf32>,
    %54 = vector.extract_strided_slice %14 {offsets = [0, 16], sizes = [8, 8], strides = [1, 1]} : vector<16x32xf32> to vector<8x8xf32>
    %55 = vector.extract_strided_slice %19 {offsets = [0, 8], sizes = [8, 8], strides = [1, 1]} : vector<16x16xf32> to vector<8x8xf32>
    %56 = vector.extract_strided_slice %7 {offsets = [0, 8], sizes = [8, 8], strides = [1, 1]} : vector<16x16xf32> to vector<8x8xf32>
    %cst_18 = arith.constant dense<0.000000e+00> : vector<8x8xf32>
    %57 = tpu.matmul %54, %55, %cst_18 {dimension_numbers = #tpu.dot_dimension_numbers<[1], [1], [0], [0], [0, 0, 1, 0], [], []>} : vector<8x8xf32>, vector<8x8xf32>, vector<8x8xf32> -> vector<8x8xf32>
    %58 = arith.addf %57, %2 : vector<8x8xf32>
    %cst_19 = arith.constant dense<0xFF800000> : vector<8xf32>
    %59 = vector.multi_reduction <maximumf>, %58, %cst_19 [1] : vector<8x8xf32> to vector<8xf32>
    %60 = vector.shape_cast %59 : vector<8xf32> to vector<8x1xf32>
    %61 = vector.broadcast %60 : vector<8x1xf32> to vector<8x8xf32>
    %62 = arith.subf %58, %61 : vector<8x8xf32>
    %63 = math.exp %62 : vector<8x8xf32>
    %cst_20 = arith.constant dense<0.000000e+00> : vector<8xf32>
    %64 = vector.multi_reduction <add>, %63, %cst_20 [1] : vector<8x8xf32> to vector<8xf32>
    %65 = vector.shape_cast %64 : vector<8xf32> to vector<8x1xf32>
    %66 = tpu.reciprocal %65 {approx = true} : vector<8x1xf32> -> vector<8x1xf32>
    %67 = vector.broadcast %66 : vector<8x1xf32> to vector<8x8xf32>
    %68 = arith.mulf %63, %67 : vector<8x8xf32>
    %cst_21 = arith.constant dense<0.000000e+00> : vector<8x8xf32>
    %69 = tpu.matmul %68, %56, %cst_21 {dimension_numbers = #tpu.dot_dimension_numbers<[1], [0], [0], [1], [0, 0, 1, 1], [], []>} : vector<8x8xf32>, vector<8x8xf32>, vector<8x8xf32> -> vector<8x8xf32>
    %c0_22 = arith.constant 0 : index
    %c16 = arith.constant 16 : index
    %70 = vector.load %arg7[%c0_22, %c16] : memref<16x32xf32, #tpu.memory_space<vmem>>, vector<8x8xf32>
    tpu.vector_store %arg7[%c0_22, %c16], %69 {strides = array<i32>} : memref<16x32xf32, #tpu.memory_space<vmem>>, vector<8x8xf32>,
    %71 = vector.extract_strided_slice %14 {offsets = [0, 24], sizes = [8, 8], strides = [1, 1]} : vector<16x32xf32> to vector<8x8xf32>
    %72 = vector.extract_strided_slice %19 {offsets = [0, 8], sizes = [8, 8], strides = [1, 1]} : vector<16x16xf32> to vector<8x8xf32>
    %73 = vector.extract_strided_slice %7 {offsets = [0, 8], sizes = [8, 8], strides = [1, 1]} : vector<16x16xf32> to vector<8x8xf32>
    %cst_23 = arith.constant dense<0.000000e+00> : vector<8x8xf32>
    %74 = tpu.matmul %71, %72, %cst_23 {dimension_numbers = #tpu.dot_dimension_numbers<[1], [1], [0], [0], [0, 0, 1, 0], [], []>} : vector<8x8xf32>, vector<8x8xf32>, vector<8x8xf32> -> vector<8x8xf32>
    %75 = arith.addf %74, %2 : vector<8x8xf32>
    %cst_24 = arith.constant dense<0xFF800000> : vector<8xf32>
    %76 = vector.multi_reduction <maximumf>, %75, %cst_24 [1] : vector<8x8xf32> to vector<8xf32>
    %77 = vector.shape_cast %76 : vector<8xf32> to vector<8x1xf32>
    %78 = vector.broadcast %77 : vector<8x1xf32> to vector<8x8xf32>
    %79 = arith.subf %75, %78 : vector<8x8xf32>
    %80 = math.exp %79 : vector<8x8xf32>
    %cst_25 = arith.constant dense<0.000000e+00> : vector<8xf32>
    %81 = vector.multi_reduction <add>, %80, %cst_25 [1] : vector<8x8xf32> to vector<8xf32>
    %82 = vector.shape_cast %81 : vector<8xf32> to vector<8x1xf32>
    %83 = tpu.reciprocal %82 {approx = true} : vector<8x1xf32> -> vector<8x1xf32>
    %84 = vector.broadcast %83 : vector<8x1xf32> to vector<8x8xf32>
    %85 = arith.mulf %80, %84 : vector<8x8xf32>
    %cst_26 = arith.constant dense<0.000000e+00> : vector<8x8xf32>
    %86 = tpu.matmul %85, %73, %cst_26 {dimension_numbers = #tpu.dot_dimension_numbers<[1], [0], [0], [1], [0, 0, 1, 1], [], []>} : vector<8x8xf32>, vector<8x8xf32>, vector<8x8xf32> -> vector<8x8xf32>
    %c0_27 = arith.constant 0 : index
    %c24 = arith.constant 24 : index
    %87 = vector.load %arg7[%c0_27, %c24] : memref<16x32xf32, #tpu.memory_space<vmem>>, vector<8x8xf32>
    tpu.vector_store %arg7[%c0_27, %c24], %86 {strides = array<i32>} : memref<16x32xf32, #tpu.memory_space<vmem>>, vector<8x8xf32>,
    %88 = vector.extract_strided_slice %14 {offsets = [8, 0], sizes = [8, 8], strides = [1, 1]} : vector<16x32xf32> to vector<8x8xf32>
    %89 = vector.extract_strided_slice %19 {offsets = [8, 0], sizes = [8, 8], strides = [1, 1]} : vector<16x16xf32> to vector<8x8xf32>
    %90 = vector.extract_strided_slice %7 {offsets = [8, 0], sizes = [8, 8], strides = [1, 1]} : vector<16x16xf32> to vector<8x8xf32>
    %cst_28 = arith.constant dense<0.000000e+00> : vector<8x8xf32>
    %91 = tpu.matmul %88, %89, %cst_28 {dimension_numbers = #tpu.dot_dimension_numbers<[1], [1], [0], [0], [0, 0, 1, 0], [], []>} : vector<8x8xf32>, vector<8x8xf32>, vector<8x8xf32> -> vector<8x8xf32>
    %92 = arith.addf %91, %2 : vector<8x8xf32>
    %cst_29 = arith.constant dense<0xFF800000> : vector<8xf32>
    %93 = vector.multi_reduction <maximumf>, %92, %cst_29 [1] : vector<8x8xf32> to vector<8xf32>
    %94 = vector.shape_cast %93 : vector<8xf32> to vector<8x1xf32>
    %95 = vector.broadcast %94 : vector<8x1xf32> to vector<8x8xf32>
    %96 = arith.subf %92, %95 : vector<8x8xf32>
    %97 = math.exp %96 : vector<8x8xf32>
    %cst_30 = arith.constant dense<0.000000e+00> : vector<8xf32>
    %98 = vector.multi_reduction <add>, %97, %cst_30 [1] : vector<8x8xf32> to vector<8xf32>
    %99 = vector.shape_cast %98 : vector<8xf32> to vector<8x1xf32>
    %100 = tpu.reciprocal %99 {approx = true} : vector<8x1xf32> -> vector<8x1xf32>
    %101 = vector.broadcast %100 : vector<8x1xf32> to vector<8x8xf32>
    %102 = arith.mulf %97, %101 : vector<8x8xf32>
    %cst_31 = arith.constant dense<0.000000e+00> : vector<8x8xf32>
    %103 = tpu.matmul %102, %90, %cst_31 {dimension_numbers = #tpu.dot_dimension_numbers<[1], [0], [0], [1], [0, 0, 1, 1], [], []>} : vector<8x8xf32>, vector<8x8xf32>, vector<8x8xf32> -> vector<8x8xf32>
    %c8_32 = arith.constant 8 : index
    %c0_33 = arith.constant 0 : index
    %104 = vector.load %arg7[%c8_32, %c0_33] : memref<16x32xf32, #tpu.memory_space<vmem>>, vector<8x8xf32>
    tpu.vector_store %arg7[%c8_32, %c0_33], %103 {strides = array<i32>} : memref<16x32xf32, #tpu.memory_space<vmem>>, vector<8x8xf32>,
    %105 = vector.extract_strided_slice %14 {offsets = [8, 8], sizes = [8, 8], strides = [1, 1]} : vector<16x32xf32> to vector<8x8xf32>
    %106 = vector.extract_strided_slice %19 {offsets = [8, 0], sizes = [8, 8], strides = [1, 1]} : vector<16x16xf32> to vector<8x8xf32>
    %107 = vector.extract_strided_slice %7 {offsets = [8, 0], sizes = [8, 8], strides = [1, 1]} : vector<16x16xf32> to vector<8x8xf32>
    %cst_34 = arith.constant dense<0.000000e+00> : vector<8x8xf32>
    %108 = tpu.matmul %105, %106, %cst_34 {dimension_numbers = #tpu.dot_dimension_numbers<[1], [1], [0], [0], [0, 0, 1, 0], [], []>} : vector<8x8xf32>, vector<8x8xf32>, vector<8x8xf32> -> vector<8x8xf32>
    %109 = arith.addf %108, %2 : vector<8x8xf32>
    %cst_35 = arith.constant dense<0xFF800000> : vector<8xf32>
    %110 = vector.multi_reduction <maximumf>, %109, %cst_35 [1] : vector<8x8xf32> to vector<8xf32>
    %111 = vector.shape_cast %110 : vector<8xf32> to vector<8x1xf32>
    %112 = vector.broadcast %111 : vector<8x1xf32> to vector<8x8xf32>
    %113 = arith.subf %109, %112 : vector<8x8xf32>
    %114 = math.exp %113 : vector<8x8xf32>
    %cst_36 = arith.constant dense<0.000000e+00> : vector<8xf32>
    %115 = vector.multi_reduction <add>, %114, %cst_36 [1] : vector<8x8xf32> to vector<8xf32>
    %116 = vector.shape_cast %115 : vector<8xf32> to vector<8x1xf32>
    %117 = tpu.reciprocal %116 {approx = true} : vector<8x1xf32> -> vector<8x1xf32>
    %118 = vector.broadcast %117 : vector<8x1xf32> to vector<8x8xf32>
    %119 = arith.mulf %114, %118 : vector<8x8xf32>
    %cst_37 = arith.constant dense<0.000000e+00> : vector<8x8xf32>
    %120 = tpu.matmul %119, %107, %cst_37 {dimension_numbers = #tpu.dot_dimension_numbers<[1], [0], [0], [1], [0, 0, 1, 1], [], []>} : vector<8x8xf32>, vector<8x8xf32>, vector<8x8xf32> -> vector<8x8xf32>
    %c8_38 = arith.constant 8 : index
    %c8_39 = arith.constant 8 : index
    %121 = vector.load %arg7[%c8_38, %c8_39] : memref<16x32xf32, #tpu.memory_space<vmem>>, vector<8x8xf32>
    tpu.vector_store %arg7[%c8_38, %c8_39], %120 {strides = array<i32>} : memref<16x32xf32, #tpu.memory_space<vmem>>, vector<8x8xf32>,
    %122 = vector.extract_strided_slice %14 {offsets = [8, 16], sizes = [8, 8], strides = [1, 1]} : vector<16x32xf32> to vector<8x8xf32>
    %123 = vector.extract_strided_slice %19 {offsets = [8, 8], sizes = [8, 8], strides = [1, 1]} : vector<16x16xf32> to vector<8x8xf32>
    %124 = vector.extract_strided_slice %7 {offsets = [8, 8], sizes = [8, 8], strides = [1, 1]} : vector<16x16xf32> to vector<8x8xf32>
    %cst_40 = arith.constant dense<0.000000e+00> : vector<8x8xf32>
    %125 = tpu.matmul %122, %123, %cst_40 {dimension_numbers = #tpu.dot_dimension_numbers<[1], [1], [0], [0], [0, 0, 1, 0], [], []>} : vector<8x8xf32>, vector<8x8xf32>, vector<8x8xf32> -> vector<8x8xf32>
    %126 = arith.addf %125, %2 : vector<8x8xf32>
    %cst_41 = arith.constant dense<0xFF800000> : vector<8xf32>
    %127 = vector.multi_reduction <maximumf>, %126, %cst_41 [1] : vector<8x8xf32> to vector<8xf32>
    %128 = vector.shape_cast %127 : vector<8xf32> to vector<8x1xf32>
    %129 = vector.broadcast %128 : vector<8x1xf32> to vector<8x8xf32>
    %130 = arith.subf %126, %129 : vector<8x8xf32>
    %131 = math.exp %130 : vector<8x8xf32>
    %cst_42 = arith.constant dense<0.000000e+00> : vector<8xf32>
    %132 = vector.multi_reduction <add>, %131, %cst_42 [1] : vector<8x8xf32> to vector<8xf32>
    %133 = vector.shape_cast %132 : vector<8xf32> to vector<8x1xf32>
    %134 = tpu.reciprocal %133 {approx = true} : vector<8x1xf32> -> vector<8x1xf32>
    %135 = vector.broadcast %134 : vector<8x1xf32> to vector<8x8xf32>
    %136 = arith.mulf %131, %135 : vector<8x8xf32>
    %cst_43 = arith.constant dense<0.000000e+00> : vector<8x8xf32>
    %137 = tpu.matmul %136, %124, %cst_43 {dimension_numbers = #tpu.dot_dimension_numbers<[1], [0], [0], [1], [0, 0, 1, 1], [], []>} : vector<8x8xf32>, vector<8x8xf32>, vector<8x8xf32> -> vector<8x8xf32>
    %c8_44 = arith.constant 8 : index
    %c16_45 = arith.constant 16 : index
    %138 = vector.load %arg7[%c8_44, %c16_45] : memref<16x32xf32, #tpu.memory_space<vmem>>, vector<8x8xf32>
    tpu.vector_store %arg7[%c8_44, %c16_45], %137 {strides = array<i32>} : memref<16x32xf32, #tpu.memory_space<vmem>>, vector<8x8xf32>,
    %139 = vector.extract_strided_slice %14 {offsets = [8, 24], sizes = [8, 8], strides = [1, 1]} : vector<16x32xf32> to vector<8x8xf32>
    %140 = vector.extract_strided_slice %19 {offsets = [8, 8], sizes = [8, 8], strides = [1, 1]} : vector<16x16xf32> to vector<8x8xf32>
    %141 = vector.extract_strided_slice %7 {offsets = [8, 8], sizes = [8, 8], strides = [1, 1]} : vector<16x16xf32> to vector<8x8xf32>
    %cst_46 = arith.constant dense<0.000000e+00> : vector<8x8xf32>
    %142 = tpu.matmul %139, %140, %cst_46 {dimension_numbers = #tpu.dot_dimension_numbers<[1], [1], [0], [0], [0, 0, 1, 0], [], []>} : vector<8x8xf32>, vector<8x8xf32>, vector<8x8xf32> -> vector<8x8xf32>
    %143 = arith.addf %142, %2 : vector<8x8xf32>
    %cst_47 = arith.constant dense<0xFF800000> : vector<8xf32>
    %144 = vector.multi_reduction <maximumf>, %143, %cst_47 [1] : vector<8x8xf32> to vector<8xf32>
    %145 = vector.shape_cast %144 : vector<8xf32> to vector<8x1xf32>
    %146 = vector.broadcast %145 : vector<8x1xf32> to vector<8x8xf32>
    %147 = arith.subf %143, %146 : vector<8x8xf32>
    %148 = math.exp %147 : vector<8x8xf32>
    %cst_48 = arith.constant dense<0.000000e+00> : vector<8xf32>
    %149 = vector.multi_reduction <add>, %148, %cst_48 [1] : vector<8x8xf32> to vector<8xf32>
    %150 = vector.shape_cast %149 : vector<8xf32> to vector<8x1xf32>
    %151 = tpu.reciprocal %150 {approx = true} : vector<8x1xf32> -> vector<8x1xf32>
    %152 = vector.broadcast %151 : vector<8x1xf32> to vector<8x8xf32>
    %153 = arith.mulf %148, %152 : vector<8x8xf32>
    %cst_49 = arith.constant dense<0.000000e+00> : vector<8x8xf32>
    %154 = tpu.matmul %153, %141, %cst_49 {dimension_numbers = #tpu.dot_dimension_numbers<[1], [0], [0], [1], [0, 0, 1, 1], [], []>} : vector<8x8xf32>, vector<8x8xf32>, vector<8x8xf32> -> vector<8x8xf32>
    %c8_50 = arith.constant 8 : index
    %c24_51 = arith.constant 24 : index
    %155 = vector.load %arg7[%c8_50, %c24_51] : memref<16x32xf32, #tpu.memory_space<vmem>>, vector<8x8xf32>
    tpu.vector_store %arg7[%c8_50, %c24_51], %154 {strides = array<i32>} : memref<16x32xf32, #tpu.memory_space<vmem>>, vector<8x8xf32>,
    %c0_52 = arith.constant 0 : index
    %c0_53 = arith.constant 0 : index
    %156 = vector.load %arg7[%c0_52, %c0_53] : memref<16x32xf32, #tpu.memory_space<vmem>>, vector<16x32xf32>
    %157 = arith.truncf %156 : vector<16x32xf32> to vector<16x32xbf16>
    %c0_54 = arith.constant 0 : index
    %c0_55 = arith.constant 0 : index
    %158 = vector.load %arg5[%c0_54, %c0_55] : memref<32x32xbf16, #tpu.memory_space<vmem>>, vector<32x32xbf16>
    %cst_56 = arith.constant dense<0.000000e+00> : vector<16x32xf32>
    %159 = tpu.matmul %157, %158, %cst_56 {dimension_numbers = #tpu.dot_dimension_numbers<[1], [0], [0], [1], [0, 0, 1, 1], [], []>} : vector<16x32xbf16>, vector<32x32xbf16>, vector<16x32xf32> -> vector<16x32xf32>
    %c0_57 = arith.constant 0 : index
    %c0_58 = arith.constant 0 : index
    %160 = vector.load %arg6[%c0_57, %c0_58] : memref<16x32xf32, #tpu.memory_space<vmem>>, vector<16x32xf32>
    tpu.vector_store %arg6[%c0_57, %c0_58], %159 {strides = array<i32>} : memref<16x32xf32, #tpu.memory_space<vmem>>, vector<16x32xf32>,
    return
  }
  func.func @transform_0(%arg0: i32) -> (i32, i32) {
    %c0_i32 = arith.constant 0 : i32
    %c0_i32_0 = arith.constant 0 : i32
    %c0_i32_1 = arith.constant 0 : i32
    return %c0_i32, %c0_i32_0 : i32, i32
  }
  func.func @transform_1(%arg0: i32) -> (i32, i32) {
    %c0_i32 = arith.constant 0 : i32
    %c0_i32_0 = arith.constant 0 : i32
    %c0_i32_1 = arith.constant 0 : i32
    return %c0_i32, %c0_i32_0 : i32, i32
  }
  func.func @transform_2(%arg0: i32) -> (i32, i32) {
    %c0_i32 = arith.constant 0 : i32
    %c0_i32_0 = arith.constant 0 : i32
    %c0_i32_1 = arith.constant 0 : i32
    return %c0_i32, %c0_i32_0 : i32, i32
  }
  func.func @transform_3(%arg0: i32) -> (i32, i32) {
    %c0_i32 = arith.constant 0 : i32
    %c0_i32_0 = arith.constant 0 : i32
    %c0_i32_1 = arith.constant 0 : i32
    return %c0_i32, %c0_i32_0 : i32, i32
  }
  func.func @transform_4(%arg0: i32) -> (i32, i32) {
    %c0_i32 = arith.constant 0 : i32
    %c0_i32_0 = arith.constant 0 : i32
    %c0_i32_1 = arith.constant 0 : i32
    return %c0_i32, %c0_i32_0 : i32, i32
  }
  func.func @transform_5(%arg0: i32) -> (i32, i32) {
    %c0_i32 = arith.constant 0 : i32
    %c0_i32_0 = arith.constant 0 : i32
    %c0_i32_1 = arith.constant 0 : i32
    return %c0_i32, %c0_i32_0 : i32, i32
  }
}

</mosaic_0001>

<llo_original>
// kernel: tpu_custom_call.1
$region0: #{tpu_custom_call.1}
  #allocation0 [shape = 'u32[]', space=smem, size = 0x4, offset = 0x4, fixed_abs, tag = 'smem constant byte address 0x4 - core index']
  #allocation1 [shape = 'u32[144,128]{1,0:T(1,128)}', space=vmem, size = 0x12000, scoped, tag = 'internal scratch']
  #allocation2 [shape = 'f32[16,32]{1,0:T(8,128)}', space=vmem, size = 0x2000, scoped, tag = 'scratch operand']
  %s0 = inlined_call_operand.hbm [shape: bf16[16,32], index: 0, kind: input, shape index: {}]
  %s1 = inlined_call_operand.hbm [shape: f32[16,96], index: 1, kind: input, shape index: {}]
  %s2 = inlined_call_operand.hbm [shape: f32[8,8], index: 2, kind: input, shape index: {}]
  %s3 = inlined_call_operand.hbm [shape: bf16[32,112], index: 3, kind: input, shape index: {}]
  %s4 = inlined_call_operand.hbm [shape: bf16[32,32], index: 4, kind: input, shape index: {}]
  %s5 = inlined_call_operand.hbm [shape: f32[16,32], index: 5, kind: output, shape index: {}]
  %s6 = sld [smem:[#allocation0]]
  $region50: #{tpu_custom_call.1} parent=0
    _
  %s8 = ssub.s32 1, %s6
  %s9 = scalar_select 0, %s8, %s6
  $region1: #{tpu_custom_call.1} parent=0
    #allocation3 [shape = 'u8[4096]{0}', space=vmem, size = 0x1000, scoped, tag = 'input window, operand 0, single buffered']
    #allocation4 [shape = 's32[1]{0}', space=sflag, size = 0x4, scoped, tag = 'scoped memory for tpu_custom_call.1']
    #allocation5 [shape = 's32[1]{0}', space=sflag, size = 0x4, scoped, tag = 'scoped memory for tpu_custom_call.1']
    #allocation6 [shape = 'u8[8192]{0}', space=vmem, size = 0x2000, scoped, tag = 'input window, operand 1, single buffered']
    #allocation7 [shape = 's32[1]{0}', space=sflag, size = 0x4, scoped, tag = 'scoped memory for tpu_custom_call.1']
    #allocation8 [shape = 'u8[4096]{0}', space=vmem, size = 0x1000, scoped, tag = 'input window, operand 2, single buffered']
    #allocation9 [shape = 'u8[8192]{0}', space=vmem, size = 0x2000, scoped, tag = 'input window, operand 3, single buffered']
    #allocation10 [shape = 's32[1]{0}', space=sflag, size = 0x4, scoped, tag = 'scoped memory for tpu_custom_call.1']
    #allocation11 [shape = 'u8[8192]{0}', space=vmem, size = 0x2000, scoped, tag = 'input window, operand 4, single buffered']
    #allocation12 [shape = 'u8[8192]{0}', space=vmem, size = 0x2000, scoped, tag = 'output window, operand 0, single buffered']
    %10 = vsyncpa [#allocation4], 0
    %11 = vsyncpa [#allocation7], 0
    %12 = vsyncpa [#allocation10], 0
    %13 = vsyncpa [#allocation5], 0
    // Predicated region
    $region2: #{tpu_custom_call.1} parent=1 // pred_check
      _
    $region3: #{tpu_custom_call.1} parent=1 // pred_check_branch
      %15 = sbr.rel (0) target = $region5
    $region4: #{tpu_custom_call.1} parent=1 // pred_region
      %s17 = ssub.s32 128, 128
      %18 = vsyncadd [#allocation4], %s17
      %s19 = sshll.u32 [#allocation3], 4
      %s20 = int_to_ptr.vmem [resolvable:$true] %s19
      %25 = dma.hbm_to_vmem [thread:$0]  %s0, 128, %s20, [#allocation4], 64, 64, 4
    $region5: #{tpu_custom_call.1} parent=1 // pred_fallthru
      _
    // Predicated region
    $region6: #{tpu_custom_call.1} parent=1 // pred_check
      _
    $region7: #{tpu_custom_call.1} parent=1 // pred_check_branch
      %27 = sbr.rel (0) target = $region9
    $region8: #{tpu_custom_call.1} parent=1 // pred_region
      %s29 = ssub.s32 256, 256
      %30 = vsyncadd [#allocation7], %s29
      %s31 = sshll.u32 [#allocation6], 4
      %s32 = int_to_ptr.vmem [resolvable:$true] %s31
      %37 = dma.hbm_to_vmem [thread:$0]  %s1, 256, %s32, [#allocation7], 128, 128, 8
    $region9: #{tpu_custom_call.1} parent=1 // pred_fallthru
      _
    // Predicated region
    $region10: #{tpu_custom_call.1} parent=1 // pred_check
      _
    $region11: #{tpu_custom_call.1} parent=1 // pred_check_branch
      %39 = sbr.rel (0) target = $region13
    $region12: #{tpu_custom_call.1} parent=1 // pred_region
      %s41 = ssub.s32 128, 128
      %42 = vsyncadd [#allocation7], %s41
      %s44 = sshll.u32 [#allocation8], 4
      %s45 = int_to_ptr.vmem [resolvable:$true] %s44
      %47 = dma.hbm_to_vmem [thread:$0]  %s2, 128, %s45, [#allocation7]
    $region13: #{tpu_custom_call.1} parent=1 // pred_fallthru
      _
    // Predicated region
    $region14: #{tpu_custom_call.1} parent=1 // pred_check
      _
    $region15: #{tpu_custom_call.1} parent=1 // pred_check_branch
      %49 = sbr.rel (0) target = $region17
    $region16: #{tpu_custom_call.1} parent=1 // pred_region
      %s51 = ssub.s32 256, 256
      %52 = vsyncadd [#allocation10], %s51
      %s53 = sshll.u32 [#allocation9], 4
      %s54 = int_to_ptr.vmem [resolvable:$true] %s53
      %59 = dma.hbm_to_vmem [thread:$0]  %s3, 256, %s54, [#allocation10], 64, 64, 4
    $region17: #{tpu_custom_call.1} parent=1 // pred_fallthru
      _
    // Predicated region
    $region18: #{tpu_custom_call.1} parent=1 // pred_check
      _
    $region19: #{tpu_custom_call.1} parent=1 // pred_check_branch
      %61 = sbr.rel (0) target = $region21
    $region20: #{tpu_custom_call.1} parent=1 // pred_region
      %s63 = ssub.s32 256, 256
      %64 = vsyncadd [#allocation10], %s63
      %s65 = sshll.u32 [#allocation11], 4
      %s66 = int_to_ptr.vmem [resolvable:$true] %s65
      %71 = dma.hbm_to_vmem [thread:$0]  %s4, 256, %s66, [#allocation10], 64, 64, 4
    $region21: #{tpu_custom_call.1} parent=1 // pred_fallthru
      _
    // Predicated region
    $region22: #{tpu_custom_call.1} parent=1 // pred_check
      _
    $region23: #{tpu_custom_call.1} parent=1 // pred_check_branch
      %73 = sbr.rel (0) target = $region25
    $region24: #{tpu_custom_call.1} parent=1 // pred_region
      %74 = dma.done [#allocation4], 128
    $region25: #{tpu_custom_call.1} parent=1 // pred_fallthru
      _
    // Predicated region
    $region26: #{tpu_custom_call.1} parent=1 // pred_check
      _
    $region27: #{tpu_custom_call.1} parent=1 // pred_check_branch
      %76 = sbr.rel (0) target = $region29
    $region28: #{tpu_custom_call.1} parent=1 // pred_region
      %77 = dma.done [#allocation7], 256
    $region29: #{tpu_custom_call.1} parent=1 // pred_fallthru
      _
    // Predicated region
    $region30: #{tpu_custom_call.1} parent=1 // pred_check
      _
    $region31: #{tpu_custom_call.1} parent=1 // pred_check_branch
      %79 = sbr.rel (0) target = $region33
    $region32: #{tpu_custom_call.1} parent=1 // pred_region
      %80 = dma.done [#allocation7], 128
    $region33: #{tpu_custom_call.1} parent=1 // pred_fallthru
      _
    // Predicated region
    $region34: #{tpu_custom_call.1} parent=1 // pred_check
      _
    $region35: #{tpu_custom_call.1} parent=1 // pred_check_branch
      %82 = sbr.rel (0) target = $region37
    $region36: #{tpu_custom_call.1} parent=1 // pred_region
      %83 = dma.done [#allocation10], 256
    $region37: #{tpu_custom_call.1} parent=1 // pred_fallthru
      _
    // Predicated region
    $region38: #{tpu_custom_call.1} parent=1 // pred_check
      _
    $region39: #{tpu_custom_call.1} parent=1 // pred_check_branch
      %85 = sbr.rel (0) target = $region41
    $region40: #{tpu_custom_call.1} parent=1 // pred_region
      %86 = dma.done [#allocation10], 256
    $region41: #{tpu_custom_call.1} parent=1 // pred_fallthru
      _
    %v88 = vld [vmem:[#allocation3] sm:$0xf]
    %v89 = vld [vmem:[#allocation3 + $0x4] sm:$0xf]
    %v90 = vld [vmem:[#allocation6] sm:$0xff]
    %v91 = vld [vmem:[#allocation6 + $0x8] sm:$0xff]
    %v92 = vld [vmem:[#allocation8] sm:$0xff]
    %v93 = vld [vmem:[#allocation9] sm:$0xf]
    %v94 = vld [vmem:[#allocation9 + $0x4] sm:$0xf]
    %v95 = vld [vmem:[#allocation9 + $0x8] sm:$0xf]
    %v96 = vld [vmem:[#allocation9 + $0xc] sm:$0xf]
    %v99 = vunpack.c.l.b16 %v88
    %v100 = vunpack.c.l.b16 %v89
    %v101 = vpack.c.b16 %v100, %v99
    %v106 = vunpack.c.l.b16 %v93
    %v107 = vunpack.c.l.b16 %v94
    %v108 = vunpack.c.l.b16 %v95
    %v109 = vunpack.c.l.b16 %v96
    %v110 = vpack.c.b16 %v107, %v106
    %v111 = vpack.c.b16 %v109, %v108
    %vm114 = vcmask 261120
    %v116 = vsel %vm114, %v101, 0
    %118 = vmatprep.subr.bf16.mxu0 0
    %119 = vmatpush1.bf16.msra.mxu0 0
    %120 = vmatprep.subr.bf16.mxu0 0
    %121 = vmatpush1.bf16.msra.mxu0 0
    %122 = vmatprep.subr.bf16.mxu0 0
    %123 = vmatpush1.bf16.msra.mxu0 0
    %124 = vmatprep.subr.bf16.mxu0 0
    %125 = vmatpush1.bf16.msra.mxu0 0
    %126 = vmatprep.subr.bf16.mxu0 0
    %127 = vmatpush1.bf16.msra.mxu0 0
    %128 = vmatprep.subr.bf16.mxu0 0
    %129 = vmatpush1.bf16.msra.mxu0 0
    %130 = vmatprep.subr.bf16.mxu0 0
    %131 = vmatpush1.bf16.msra.mxu0 %v111
    %132 = vmatprep.subr.bf16.mxu0 0
    %133 = vmatpush1.bf16.msra.mxu0 %v110
    %134 = vmatprep.subr.bf16.mxu0 0
    %135 = vmatpush2.bf16.msra.mxu0 0
    %136 = vmatprep.subr.bf16.mxu0 0
    %137 = vmatpush2.bf16.msra.mxu0 0
    %138 = vmatprep.subr.bf16.mxu0 0
    %139 = vmatpush2.bf16.msra.mxu0 0
    %140 = vmatprep.subr.bf16.mxu0 0
    %141 = vmatpush2.bf16.msra.mxu0 0
    %142 = vmatprep.subr.bf16.mxu0 0
    %143 = vmatpush2.bf16.msra.mxu0 0
    %144 = vmatprep.subr.bf16.mxu0 0
    %145 = vmatpush2.bf16.msra.mxu0 0
    %146 = vmatprep.subr.bf16.mxu0 0
    %147 = vmatpush2.bf16.msra.mxu0 0
    %148 = vmatprep.subr.bf16.mxu0 0
    %149 = vmatpush2.bf16.msra.mxu0 0
    %150 = vmatprep.mubr.bf16.mxu0 0
    %151 = vmatmul.mubr.bf16.gmra.mxu0 %v116
    %v152 = vpop.f32.mrf.mxu0
    %v153 = vadd.f32 0.0, %v152
    %v154 = vpop.f32.mrf.mxu0
    %v155 = vpop.f32.mrf.mxu0
    %v156 = vadd.f32 0.0, %v155
    %v157 = vpop.f32.mrf.mxu0
    %158 = vdwg.mxu0
    %v159 = vmul.f32 %v153, %v90
    %v160 = vmul.f32 %v156, %v91
    %163 = vrot.lane.b32.xlu0 %v90, 32
    %v164 = vpop.permute.xlu0 %163
    %165 = vrot.lane.b32.xlu0 %v91, 32
    %v166 = vpop.permute.xlu0 %165
    %v169 = vmul.f32 %v153, %v164
    %v170 = vmul.f32 %v156, %v166
    %173 = vrot.lane.b32.xlu0 %v169, 64
    %v174 = vpop.permute.xlu0 %173
    %175 = vrot.lane.b32.xlu0 %v170, 64
    %v176 = vpop.permute.xlu0 %175
    %v179 = vadd.f32 %v159, %v174
    %v180 = vadd.f32 %v160, %v176
    %181 = vrot.lane.b32.xlu0 %v90, 96
    %v182 = vpop.permute.xlu0 %181
    %183 = vrot.lane.b32.xlu0 %v91, 96
    %v184 = vpop.permute.xlu0 %183
    %v187 = vmul.f32 %v153, %v182
    %v188 = vmul.f32 %v156, %v184
    %189 = vrot.lane.b32.xlu0 %v90, 16
    %v190 = vpop.permute.xlu0 %189
    %191 = vrot.lane.b32.xlu0 %v91, 16
    %v192 = vpop.permute.xlu0 %191
    %v195 = vmul.f32 %v153, %v190
    %v196 = vmul.f32 %v156, %v192
    %199 = vrot.lane.b32.xlu0 %v195, 64
    %v200 = vpop.permute.xlu0 %199
    %201 = vrot.lane.b32.xlu0 %v196, 64
    %v202 = vpop.permute.xlu0 %201
    %v205 = vadd.f32 %v187, %v200
    %v206 = vadd.f32 %v188, %v202
    %208 = vrot.lane.b32.xlu0 %v205, 96
    %v209 = vpop.permute.xlu0 %208
    %vm210 = vcmask 64512
    %v212 = vsel %vm210, %v179, 0
    %v214 = vsel %vm210, %v209, 0
    %216 = vmatprep.subr.mxu0 0.0
    %217 = vmatpush1.xpose.msra.mxu0 0.0
    %218 = vmatprep.subr.mxu0 0.0
    %219 = vmatpush1.xpose.msra.mxu0 0.0
    %220 = vmatprep.subr.mxu0 0.0
    %221 = vmatpush1.xpose.msra.mxu0 0.0
    %222 = vmatprep.subr.mxu0 0.0
    %223 = vmatpush1.xpose.msra.mxu0 0.0
    %224 = vmatprep.subr.mxu0 0.0
    %225 = vmatpush1.xpose.msra.mxu0 0.0
    %226 = vmatprep.subr.mxu0 0.0
    %227 = vmatpush1.xpose.msra.mxu0 0.0
    %228 = vmatprep.subr.mxu0 0.0
    %229 = vmatpush1.xpose.msra.mxu0 0.0
    %230 = vmatprep.subr.mxu0 0.0
    %231 = vmatpush1.xpose.msra.mxu0 0.0
    %232 = vmatprep.subr.mxu0 0.0
    %233 = vmatpush1.xpose.msra.mxu0 0.0
    %234 = vmatprep.subr.mxu0 0.0
    %235 = vmatpush1.xpose.msra.mxu0 0.0
    %236 = vmatprep.subr.mxu0 0.0
    %237 = vmatpush1.xpose.msra.mxu0 0.0
    %238 = vmatprep.subr.mxu0 0.0
    %239 = vmatpush1.xpose.msra.mxu0 0.0
    %240 = vmatprep.subr.mxu0 0.0
    %241 = vmatpush1.xpose.msra.mxu0 0.0
    %242 = vmatprep.subr.mxu0 0.0
    %243 = vmatpush1.xpose.msra.mxu0 0.0
    %244 = vmatprep.subr.mxu0 0.0
    %245 = vmatpush1.xpose.msra.mxu0 0.0
    %246 = vmatprep.subr.mxu0 0.0
    %247 = vmatpush1.xpose.msra.mxu0 %v214
    %248 = vmatprep.subr.mxu0 0.0
    %249 = vmatpush2.xpose.msra.mxu0 0.0
    %250 = vmatprep.subr.mxu0 0.0
    %251 = vmatpush2.xpose.msra.mxu0 0.0
    %252 = vmatprep.subr.mxu0 0.0
    %253 = vmatpush2.xpose.msra.mxu0 0.0
    %254 = vmatprep.subr.mxu0 0.0
    %255 = vmatpush2.xpose.msra.mxu0 0.0
    %256 = vmatprep.subr.mxu0 0.0
    %257 = vmatpush2.xpose.msra.mxu0 0.0
    %258 = vmatprep.subr.mxu0 0.0
    %259 = vmatpush2.xpose.msra.mxu0 0.0
    %260 = vmatprep.subr.mxu0 0.0
    %261 = vmatpush2.xpose.msra.mxu0 0.0
    %262 = vmatprep.subr.mxu0 0.0
    %263 = vmatpush2.xpose.msra.mxu0 0.0
    %264 = vmatprep.subr.mxu0 0.0
    %265 = vmatpush2.xpose.msra.mxu0 0.0
    %266 = vmatprep.subr.mxu0 0.0
    %267 = vmatpush2.xpose.msra.mxu0 0.0
    %268 = vmatprep.subr.mxu0 0.0
    %269 = vmatpush2.xpose.msra.mxu0 0.0
    %270 = vmatprep.subr.mxu0 0.0
    %271 = vmatpush2.xpose.msra.mxu0 0.0
    %272 = vmatprep.subr.mxu0 0.0
    %273 = vmatpush2.xpose.msra.mxu0 0.0
    %274 = vmatprep.subr.mxu0 0.0
    %275 = vmatpush2.xpose.msra.mxu0 0.0
    %276 = vmatprep.subr.mxu0 0.0
    %277 = vmatpush2.xpose.msra.mxu0 0.0
    %278 = vmatprep.subr.mxu0 0.0
    %279 = vmatpush2.xpose.msra.mxu0 0.0
    %280 = vmatprep.mubr.f32.mxu0 0.0
    %281 = vmatmul.mubr.f32.gmra.mxu0 %v212
    %v282 = vpop.f32.mrf.mxu0
    %v283 = vadd.f32 %v92, %v282
    %v284 = vpop.f32.mrf.mxu0
    %285 = vdwg.mxu0
    %v286 = vsel %vm210, %v283, -inf
    %287 = vmax.xlane.f32.xlu0 %v286
    %v288 = vpop.xlane.xlu0 %287
    %v289 = vsub.f32 %v283, %v288
    %v290 = vmul.f32 %v289, 1.442695
    %v291 = vpow.pop %v290
    %v292 = vsel %vm210, %v291, 0.0
    %293 = vadd.xlane.f32.xlu0 %v292
    %v294 = vpop.xlane.xlu0 %293
    %v295 = vrcp.pop %v294
    %v296 = vmul.f32 %v291, %v295
    %298 = vrot.lane.b32.xlu0 %v153, 80
    %v299 = vpop.permute.xlu0 %298
    %v302 = vsel %vm210, %v296, 0
    %304 = vmatprep.subr.mxu0 0.0
    %305 = vmatpush1.msra.mxu0 0.0
    %306 = vmatprep.subr.mxu0 0.0
    %307 = vmatpush1.msra.mxu0 0.0
    %308 = vmatprep.subr.mxu0 0.0
    %309 = vmatpush1.msra.mxu0 0.0
    %310 = vmatprep.subr.mxu0 0.0
    %311 = vmatpush1.msra.mxu0 0.0
    %312 = vmatprep.subr.mxu0 0.0
    %313 = vmatpush1.msra.mxu0 0.0
    %314 = vmatprep.subr.mxu0 0.0
    %315 = vmatpush1.msra.mxu0 0.0
    %316 = vmatprep.subr.mxu0 0.0
    %317 = vmatpush1.msra.mxu0 0.0
    %318 = vmatprep.subr.mxu0 0.0
    %319 = vmatpush1.msra.mxu0 0.0
    %320 = vmatprep.subr.mxu0 0.0
    %321 = vmatpush1.msra.mxu0 0.0
    %322 = vmatprep.subr.mxu0 0.0
    %323 = vmatpush1.msra.mxu0 0.0
    %324 = vmatprep.subr.mxu0 0.0
    %325 = vmatpush1.msra.mxu0 0.0
    %326 = vmatprep.subr.mxu0 0.0
    %327 = vmatpush1.msra.mxu0 0.0
    %328 = vmatprep.subr.mxu0 0.0
    %329 = vmatpush1.msra.mxu0 0.0
    %330 = vmatprep.subr.mxu0 0.0
    %331 = vmatpush1.msra.mxu0 0.0
    %332 = vmatprep.subr.mxu0 0.0
    %333 = vmatpush1.msra.mxu0 0.0
    %334 = vmatprep.subr.mxu0 0.0
    %335 = vmatpush1.msra.mxu0 %v299
    %336 = vmatprep.subr.mxu0 0.0
    %337 = vmatpush2.msra.mxu0 0.0
    %338 = vmatprep.subr.mxu0 0.0
    %339 = vmatpush2.msra.mxu0 0.0
    %340 = vmatprep.subr.mxu0 0.0
    %341 = vmatpush2.msra.mxu0 0.0
    %342 = vmatprep.subr.mxu0 0.0
    %343 = vmatpush2.msra.mxu0 0.0
    %344 = vmatprep.subr.mxu0 0.0
    %345 = vmatpush2.msra.mxu0 0.0
    %346 = vmatprep.subr.mxu0 0.0
    %347 = vmatpush2.msra.mxu0 0.0
    %348 = vmatprep.subr.mxu0 0.0
    %349 = vmatpush2.msra.mxu0 0.0
    %350 = vmatprep.subr.mxu0 0.0
    %351 = vmatpush2.msra.mxu0 0.0
    %352 = vmatprep.subr.mxu0 0.0
    %353 = vmatpush2.msra.mxu0 0.0
    %354 = vmatprep.subr.mxu0 0.0
    %355 = vmatpush2.msra.mxu0 0.0
    %356 = vmatprep.subr.mxu0 0.0
    %357 = vmatpush2.msra.mxu0 0.0
    %358 = vmatprep.subr.mxu0 0.0
    %359 = vmatpush2.msra.mxu0 0.0
    %360 = vmatprep.subr.mxu0 0.0
    %361 = vmatpush2.msra.mxu0 0.0
    %362 = vmatprep.subr.mxu0 0.0
    %363 = vmatpush2.msra.mxu0 0.0
    %364 = vmatprep.subr.mxu0 0.0
    %365 = vmatpush2.msra.mxu0 0.0
    %366 = vmatprep.subr.mxu0 0.0
    %367 = vmatpush2.msra.mxu0 0.0
    %368 = vmatprep.mubr.f32.mxu0 0.0
    %369 = vmatmul.mubr.f32.gmra.mxu0 %v302
    %v370 = vpop.f32.mrf.mxu0
    %v371 = vadd.f32 0.0, %v370
    %v372 = vpop.f32.mrf.mxu0
    %373 = vdwg.mxu0
    %374 = vst.msk [vmem:[#allocation2] sm:$0xff] %vm210, %v371
    %375 = vrot.lane.b32.xlu0 %v179, 120
    %v376 = vpop.permute.xlu0 %375
    %v377 = vsel %vm210, %v376, 0
    %379 = vmatprep.subr.mxu0 0.0
    %380 = vmatpush1.xpose.msra.mxu0 0.0
    %381 = vmatprep.subr.mxu0 0.0
    %382 = vmatpush1.xpose.msra.mxu0 0.0
    %383 = vmatprep.subr.mxu0 0.0
    %384 = vmatpush1.xpose.msra.mxu0 0.0
    %385 = vmatprep.subr.mxu0 0.0
    %386 = vmatpush1.xpose.msra.mxu0 0.0
    %387 = vmatprep.subr.mxu0 0.0
    %388 = vmatpush1.xpose.msra.mxu0 0.0
    %389 = vmatprep.subr.mxu0 0.0
    %390 = vmatpush1.xpose.msra.mxu0 0.0
    %391 = vmatprep.subr.mxu0 0.0
    %392 = vmatpush1.xpose.msra.mxu0 0.0
    %393 = vmatprep.subr.mxu0 0.0
    %394 = vmatpush1.xpose.msra.mxu0 0.0
    %395 = vmatprep.subr.mxu0 0.0
    %396 = vmatpush1.xpose.msra.mxu0 0.0
    %397 = vmatprep.subr.mxu0 0.0
    %398 = vmatpush1.xpose.msra.mxu0 0.0
    %399 = vmatprep.subr.mxu0 0.0
    %400 = vmatpush1.xpose.msra.mxu0 0.0
    %401 = vmatprep.subr.mxu0 0.0
    %402 = vmatpush1.xpose.msra.mxu0 0.0
    %403 = vmatprep.subr.mxu0 0.0
    %404 = vmatpush1.xpose.msra.mxu0 0.0
    %405 = vmatprep.subr.mxu0 0.0
    %406 = vmatpush1.xpose.msra.mxu0 0.0
    %407 = vmatprep.subr.mxu0 0.0
    %408 = vmatpush1.xpose.msra.mxu0 0.0
    %409 = vmatprep.subr.mxu0 0.0
    %410 = vmatpush1.xpose.msra.mxu0 %v214
    %411 = vmatprep.subr.mxu0 0.0
    %412 = vmatpush2.xpose.msra.mxu0 0.0
    %413 = vmatprep.subr.mxu0 0.0
    %414 = vmatpush2.xpose.msra.mxu0 0.0
    %415 = vmatprep.subr.mxu0 0.0
    %416 = vmatpush2.xpose.msra.mxu0 0.0
    %417 = vmatprep.subr.mxu0 0.0
    %418 = vmatpush2.xpose.msra.mxu0 0.0
    %419 = vmatprep.subr.mxu0 0.0
    %420 = vmatpush2.xpose.msra.mxu0 0.0
    %421 = vmatprep.subr.mxu0 0.0
    %422 = vmatpush2.xpose.msra.mxu0 0.0
    %423 = vmatprep.subr.mxu0 0.0
    %424 = vmatpush2.xpose.msra.mxu0 0.0
    %425 = vmatprep.subr.mxu0 0.0
    %426 = vmatpush2.xpose.msra.mxu0 0.0
    %427 = vmatprep.subr.mxu0 0.0
    %428 = vmatpush2.xpose.msra.mxu0 0.0
    %429 = vmatprep.subr.mxu0 0.0
    %430 = vmatpush2.xpose.msra.mxu0 0.0
    %431 = vmatprep.subr.mxu0 0.0
    %432 = vmatpush2.xpose.msra.mxu0 0.0
    %433 = vmatprep.subr.mxu0 0.0
    %434 = vmatpush2.xpose.msra.mxu0 0.0
    %435 = vmatprep.subr.mxu0 0.0
    %436 = vmatpush2.xpose.msra.mxu0 0.0
    %437 = vmatprep.subr.mxu0 0.0
    %438 = vmatpush2.xpose.msra.mxu0 0.0
    %439 = vmatprep.subr.mxu0 0.0
    %440 = vmatpush2.xpose.msra.mxu0 0.0
    %441 = vmatprep.subr.mxu0 0.0
    %442 = vmatpush2.xpose.msra.mxu0 0.0
    %443 = vmatprep.mubr.f32.mxu0 0.0
    %444 = vmatmul.mubr.f32.gmra.mxu0 %v377
    %v445 = vpop.f32.mrf.mxu0
    %v446 = vadd.f32 %v92, %v445
    %v447 = vpop.f32.mrf.mxu0
    %448 = vdwg.mxu0
    %v449 = vsel %vm210, %v446, -inf
    %450 = vmax.xlane.f32.xlu0 %v449
    %v451 = vpop.xlane.xlu0 %450
    %v452 = vsub.f32 %v446, %v451
    %v453 = vmul.f32 %v452, 1.442695
    %v454 = vpow.pop %v453
    %v455 = vsel %vm210, %v454, 0.0
    %456 = vadd.xlane.f32.xlu0 %v455
    %v457 = vpop.xlane.xlu0 %456
    %v458 = vrcp.pop %v457
    %v459 = vmul.f32 %v454, %v458
    %v461 = vsel %vm210, %v459, 0
    %463 = vmatprep.subr.mxu0 0.0
    %464 = vmatpush1.msra.mxu0 0.0
    %465 = vmatprep.subr.mxu0 0.0
    %466 = vmatpush1.msra.mxu0 0.0
    %467 = vmatprep.subr.mxu0 0.0
    %468 = vmatpush1.msra.mxu0 0.0
    %469 = vmatprep.subr.mxu0 0.0
    %470 = vmatpush1.msra.mxu0 0.0
    %471 = vmatprep.subr.mxu0 0.0
    %472 = vmatpush1.msra.mxu0 0.0
    %473 = vmatprep.subr.mxu0 0.0
    %474 = vmatpush1.msra.mxu0 0.0
    %475 = vmatprep.subr.mxu0 0.0
    %476 = vmatpush1.msra.mxu0 0.0
    %477 = vmatprep.subr.mxu0 0.0
    %478 = vmatpush1.msra.mxu0 0.0
    %479 = vmatprep.subr.mxu0 0.0
    %480 = vmatpush1.msra.mxu0 0.0
    %481 = vmatprep.subr.mxu0 0.0
    %482 = vmatpush1.msra.mxu0 0.0
    %483 = vmatprep.subr.mxu0 0.0
    %484 = vmatpush1.msra.mxu0 0.0
    %485 = vmatprep.subr.mxu0 0.0
    %486 = vmatpush1.msra.mxu0 0.0
    %487 = vmatprep.subr.mxu0 0.0
    %488 = vmatpush1.msra.mxu0 0.0
    %489 = vmatprep.subr.mxu0 0.0
    %490 = vmatpush1.msra.mxu0 0.0
    %491 = vmatprep.subr.mxu0 0.0
    %492 = vmatpush1.msra.mxu0 0.0
    %493 = vmatprep.subr.mxu0 0.0
    %494 = vmatpush1.msra.mxu0 %v299
    %495 = vmatprep.subr.mxu0 0.0
    %496 = vmatpush2.msra.mxu0 0.0
    %497 = vmatprep.subr.mxu0 0.0
    %498 = vmatpush2.msra.mxu0 0.0
    %499 = vmatprep.subr.mxu0 0.0
    %500 = vmatpush2.msra.mxu0 0.0
    %501 = vmatprep.subr.mxu0 0.0
    %502 = vmatpush2.msra.mxu0 0.0
    %503 = vmatprep.subr.mxu0 0.0
    %504 = vmatpush2.msra.mxu0 0.0
    %505 = vmatprep.subr.mxu0 0.0
    %506 = vmatpush2.msra.mxu0 0.0
    %507 = vmatprep.subr.mxu0 0.0
    %508 = vmatpush2.msra.mxu0 0.0
    %509 = vmatprep.subr.mxu0 0.0
    %510 = vmatpush2.msra.mxu0 0.0
    %511 = vmatprep.subr.mxu0 0.0
    %512 = vmatpush2.msra.mxu0 0.0
    %513 = vmatprep.subr.mxu0 0.0
    %514 = vmatpush2.msra.mxu0 0.0
    %515 = vmatprep.subr.mxu0 0.0
    %516 = vmatpush2.msra.mxu0 0.0
    %517 = vmatprep.subr.mxu0 0.0
    %518 = vmatpush2.msra.mxu0 0.0
    %519 = vmatprep.subr.mxu0 0.0
    %520 = vmatpush2.msra.mxu0 0.0
    %521 = vmatprep.subr.mxu0 0.0
    %522 = vmatpush2.msra.mxu0 0.0
    %523 = vmatprep.subr.mxu0 0.0
    %524 = vmatpush2.msra.mxu0 0.0
    %525 = vmatprep.subr.mxu0 0.0
    %526 = vmatpush2.msra.mxu0 0.0
    %527 = vmatprep.mubr.f32.mxu0 0.0
    %528 = vmatmul.mubr.f32.gmra.mxu0 %v461
    %v529 = vpop.f32.mrf.mxu0
    %v530 = vadd.f32 0.0, %v529
    %v531 = vpop.f32.mrf.mxu0
    %532 = vdwg.mxu0
    %534 = vrot.lane.b32.xlu0 %v530, 8
    %v535 = vpop.permute.xlu0 %534
    %vm537 = vcmask 130112
    %538 = vst.msk [vmem:[#allocation2] sm:$0xff] %vm537, %v535
    %539 = vrot.lane.b32.xlu0 %v179, 112
    %v540 = vpop.permute.xlu0 %539
    %541 = vrot.lane.b32.xlu0 %v205, 88
    %v542 = vpop.permute.xlu0 %541
    %v543 = vsel %vm210, %v540, 0
    %v545 = vsel %vm210, %v542, 0
    %547 = vmatprep.subr.mxu0 0.0
    %548 = vmatpush1.xpose.msra.mxu0 0.0
    %549 = vmatprep.subr.mxu0 0.0
    %550 = vmatpush1.xpose.msra.mxu0 0.0
    %551 = vmatprep.subr.mxu0 0.0
    %552 = vmatpush1.xpose.msra.mxu0 0.0
    %553 = vmatprep.subr.mxu0 0.0
    %554 = vmatpush1.xpose.msra.mxu0 0.0
    %555 = vmatprep.subr.mxu0 0.0
    %556 = vmatpush1.xpose.msra.mxu0 0.0
    %557 = vmatprep.subr.mxu0 0.0
    %558 = vmatpush1.xpose.msra.mxu0 0.0
    %559 = vmatprep.subr.mxu0 0.0
    %560 = vmatpush1.xpose.msra.mxu0 0.0
    %561 = vmatprep.subr.mxu0 0.0
    %562 = vmatpush1.xpose.msra.mxu0 0.0
    %563 = vmatprep.subr.mxu0 0.0
    %564 = vmatpush1.xpose.msra.mxu0 0.0
    %565 = vmatprep.subr.mxu0 0.0
    %566 = vmatpush1.xpose.msra.mxu0 0.0
    %567 = vmatprep.subr.mxu0 0.0
    %568 = vmatpush1.xpose.msra.mxu0 0.0
    %569 = vmatprep.subr.mxu0 0.0
    %570 = vmatpush1.xpose.msra.mxu0 0.0
    %571 = vmatprep.subr.mxu0 0.0
    %572 = vmatpush1.xpose.msra.mxu0 0.0
    %573 = vmatprep.subr.mxu0 0.0
    %574 = vmatpush1.xpose.msra.mxu0 0.0
    %575 = vmatprep.subr.mxu0 0.0
    %576 = vmatpush1.xpose.msra.mxu0 0.0
    %577 = vmatprep.subr.mxu0 0.0
    %578 = vmatpush1.xpose.msra.mxu0 %v545
    %579 = vmatprep.subr.mxu0 0.0
    %580 = vmatpush2.xpose.msra.mxu0 0.0
    %581 = vmatprep.subr.mxu0 0.0
    %582 = vmatpush2.xpose.msra.mxu0 0.0
    %583 = vmatprep.subr.mxu0 0.0
    %584 = vmatpush2.xpose.msra.mxu0 0.0
    %585 = vmatprep.subr.mxu0 0.0
    %586 = vmatpush2.xpose.msra.mxu0 0.0
    %587 = vmatprep.subr.mxu0 0.0
    %588 = vmatpush2.xpose.msra.mxu0 0.0
    %589 = vmatprep.subr.mxu0 0.0
    %590 = vmatpush2.xpose.msra.mxu0 0.0
    %591 = vmatprep.subr.mxu0 0.0
    %592 = vmatpush2.xpose.msra.mxu0 0.0
    %593 = vmatprep.subr.mxu0 0.0
    %594 = vmatpush2.xpose.msra.mxu0 0.0
    %595 = vmatprep.subr.mxu0 0.0
    %596 = vmatpush2.xpose.msra.mxu0 0.0
    %597 = vmatprep.subr.mxu0 0.0
    %598 = vmatpush2.xpose.msra.mxu0 0.0
    %599 = vmatprep.subr.mxu0 0.0
    %600 = vmatpush2.xpose.msra.mxu0 0.0
    %601 = vmatprep.subr.mxu0 0.0
    %602 = vmatpush2.xpose.msra.mxu0 0.0
    %603 = vmatprep.subr.mxu0 0.0
    %604 = vmatpush2.xpose.msra.mxu0 0.0
    %605 = vmatprep.subr.mxu0 0.0
    %606 = vmatpush2.xpose.msra.mxu0 0.0
    %607 = vmatprep.subr.mxu0 0.0
    %608 = vmatpush2.xpose.msra.mxu0 0.0
    %609 = vmatprep.subr.mxu0 0.0
    %610 = vmatpush2.xpose.msra.mxu0 0.0
    %611 = vmatprep.mubr.f32.mxu0 0.0
    %612 = vmatmul.mubr.f32.gmra.mxu0 %v543
    %v613 = vpop.f32.mrf.mxu0
    %v614 = vadd.f32 %v92, %v613
    %v615 = vpop.f32.mrf.mxu0
    %616 = vdwg.mxu0
    %v617 = vsel %vm210, %v614, -inf
    %618 = vmax.xlane.f32.xlu0 %v617
    %v619 = vpop.xlane.xlu0 %618
    %v620 = vsub.f32 %v614, %v619
    %v621 = vmul.f32 %v620, 1.442695
    %v622 = vpow.pop %v621
    %v623 = vsel %vm210, %v622, 0.0
    %624 = vadd.xlane.f32.xlu0 %v623
    %v625 = vpop.xlane.xlu0 %624
    %v626 = vrcp.pop %v625
    %v627 = vmul.f32 %v622, %v626
    %628 = vrot.lane.b32.xlu0 %v153, 72
    %v629 = vpop.permute.xlu0 %628
    %v632 = vsel %vm210, %v627, 0
    %634 = vmatprep.subr.mxu0 0.0
    %635 = vmatpush1.msra.mxu0 0.0
    %636 = vmatprep.subr.mxu0 0.0
    %637 = vmatpush1.msra.mxu0 0.0
    %638 = vmatprep.subr.mxu0 0.0
    %639 = vmatpush1.msra.mxu0 0.0
    %640 = vmatprep.subr.mxu0 0.0
    %641 = vmatpush1.msra.mxu0 0.0
    %642 = vmatprep.subr.mxu0 0.0
    %643 = vmatpush1.msra.mxu0 0.0
    %644 = vmatprep.subr.mxu0 0.0
    %645 = vmatpush1.msra.mxu0 0.0
    %646 = vmatprep.subr.mxu0 0.0
    %647 = vmatpush1.msra.mxu0 0.0
    %648 = vmatprep.subr.mxu0 0.0
    %649 = vmatpush1.msra.mxu0 0.0
    %650 = vmatprep.subr.mxu0 0.0
    %651 = vmatpush1.msra.mxu0 0.0
    %652 = vmatprep.subr.mxu0 0.0
    %653 = vmatpush1.msra.mxu0 0.0
    %654 = vmatprep.subr.mxu0 0.0
    %655 = vmatpush1.msra.mxu0 0.0
    %656 = vmatprep.subr.mxu0 0.0
    %657 = vmatpush1.msra.mxu0 0.0
    %658 = vmatprep.subr.mxu0 0.0
    %659 = vmatpush1.msra.mxu0 0.0
    %660 = vmatprep.subr.mxu0 0.0
    %661 = vmatpush1.msra.mxu0 0.0
    %662 = vmatprep.subr.mxu0 0.0
    %663 = vmatpush1.msra.mxu0 0.0
    %664 = vmatprep.subr.mxu0 0.0
    %665 = vmatpush1.msra.mxu0 %v629
    %666 = vmatprep.subr.mxu0 0.0
    %667 = vmatpush2.msra.mxu0 0.0
    %668 = vmatprep.subr.mxu0 0.0
    %669 = vmatpush2.msra.mxu0 0.0
    %670 = vmatprep.subr.mxu0 0.0
    %671 = vmatpush2.msra.mxu0 0.0
    %672 = vmatprep.subr.mxu0 0.0
    %673 = vmatpush2.msra.mxu0 0.0
    %674 = vmatprep.subr.mxu0 0.0
    %675 = vmatpush2.msra.mxu0 0.0
    %676 = vmatprep.subr.mxu0 0.0
    %677 = vmatpush2.msra.mxu0 0.0
    %678 = vmatprep.subr.mxu0 0.0
    %679 = vmatpush2.msra.mxu0 0.0
    %680 = vmatprep.subr.mxu0 0.0
    %681 = vmatpush2.msra.mxu0 0.0
    %682 = vmatprep.subr.mxu0 0.0
    %683 = vmatpush2.msra.mxu0 0.0
    %684 = vmatprep.subr.mxu0 0.0
    %685 = vmatpush2.msra.mxu0 0.0
    %686 = vmatprep.subr.mxu0 0.0
    %687 = vmatpush2.msra.mxu0 0.0
    %688 = vmatprep.subr.mxu0 0.0
    %689 = vmatpush2.msra.mxu0 0.0
    %690 = vmatprep.subr.mxu0 0.0
    %691 = vmatpush2.msra.mxu0 0.0
    %692 = vmatprep.subr.mxu0 0.0
    %693 = vmatpush2.msra.mxu0 0.0
    %694 = vmatprep.subr.mxu0 0.0
    %695 = vmatpush2.msra.mxu0 0.0
    %696 = vmatprep.subr.mxu0 0.0
    %697 = vmatpush2.msra.mxu0 0.0
    %698 = vmatprep.mubr.f32.mxu0 0.0
    %699 = vmatmul.mubr.f32.gmra.mxu0 %v632
    %v700 = vpop.f32.mrf.mxu0
    %v701 = vadd.f32 0.0, %v700
    %v702 = vpop.f32.mrf.mxu0
    %703 = vdwg.mxu0
    %705 = vrot.lane.b32.xlu0 %v701, 16
    %v706 = vpop.permute.xlu0 %705
    %vm708 = vcmask 195712
    %709 = vst.msk [vmem:[#allocation2] sm:$0xff] %vm708, %v706
    %710 = vrot.lane.b32.xlu0 %v179, 104
    %v711 = vpop.permute.xlu0 %710
    %v712 = vsel %vm210, %v711, 0
    %714 = vmatprep.subr.mxu0 0.0
    %715 = vmatpush1.xpose.msra.mxu0 0.0
    %716 = vmatprep.subr.mxu0 0.0
    %717 = vmatpush1.xpose.msra.mxu0 0.0
    %718 = vmatprep.subr.mxu0 0.0
    %719 = vmatpush1.xpose.msra.mxu0 0.0
    %720 = vmatprep.subr.mxu0 0.0
    %721 = vmatpush1.xpose.msra.mxu0 0.0
    %722 = vmatprep.subr.mxu0 0.0
    %723 = vmatpush1.xpose.msra.mxu0 0.0
    %724 = vmatprep.subr.mxu0 0.0
    %725 = vmatpush1.xpose.msra.mxu0 0.0
    %726 = vmatprep.subr.mxu0 0.0
    %727 = vmatpush1.xpose.msra.mxu0 0.0
    %728 = vmatprep.subr.mxu0 0.0
    %729 = vmatpush1.xpose.msra.mxu0 0.0
    %730 = vmatprep.subr.mxu0 0.0
    %731 = vmatpush1.xpose.msra.mxu0 0.0
    %732 = vmatprep.subr.mxu0 0.0
    %733 = vmatpush1.xpose.msra.mxu0 0.0
    %734 = vmatprep.subr.mxu0 0.0
    %735 = vmatpush1.xpose.msra.mxu0 0.0
    %736 = vmatprep.subr.mxu0 0.0
    %737 = vmatpush1.xpose.msra.mxu0 0.0
    %738 = vmatprep.subr.mxu0 0.0
    %739 = vmatpush1.xpose.msra.mxu0 0.0
    %740 = vmatprep.subr.mxu0 0.0
    %741 = vmatpush1.xpose.msra.mxu0 0.0
    %742 = vmatprep.subr.mxu0 0.0
    %743 = vmatpush1.xpose.msra.mxu0 0.0
    %744 = vmatprep.subr.mxu0 0.0
    %745 = vmatpush1.xpose.msra.mxu0 %v545
    %746 = vmatprep.subr.mxu0 0.0
    %747 = vmatpush2.xpose.msra.mxu0 0.0
    %748 = vmatprep.subr.mxu0 0.0
    %749 = vmatpush2.xpose.msra.mxu0 0.0
    %750 = vmatprep.subr.mxu0 0.0
    %751 = vmatpush2.xpose.msra.mxu0 0.0
    %752 = vmatprep.subr.mxu0 0.0
    %753 = vmatpush2.xpose.msra.mxu0 0.0
    %754 = vmatprep.subr.mxu0 0.0
    %755 = vmatpush2.xpose.msra.mxu0 0.0
    %756 = vmatprep.subr.mxu0 0.0
    %757 = vmatpush2.xpose.msra.mxu0 0.0
    %758 = vmatprep.subr.mxu0 0.0
    %759 = vmatpush2.xpose.msra.mxu0 0.0
    %760 = vmatprep.subr.mxu0 0.0
    %761 = vmatpush2.xpose.msra.mxu0 0.0
    %762 = vmatprep.subr.mxu0 0.0
    %763 = vmatpush2.xpose.msra.mxu0 0.0
    %764 = vmatprep.subr.mxu0 0.0
    %765 = vmatpush2.xpose.msra.mxu0 0.0
    %766 = vmatprep.subr.mxu0 0.0
    %767 = vmatpush2.xpose.msra.mxu0 0.0
    %768 = vmatprep.subr.mxu0 0.0
    %769 = vmatpush2.xpose.msra.mxu0 0.0
    %770 = vmatprep.subr.mxu0 0.0
    %771 = vmatpush2.xpose.msra.mxu0 0.0
    %772 = vmatprep.subr.mxu0 0.0
    %773 = vmatpush2.xpose.msra.mxu0 0.0
    %774 = vmatprep.subr.mxu0 0.0
    %775 = vmatpush2.xpose.msra.mxu0 0.0
    %776 = vmatprep.subr.mxu0 0.0
    %777 = vmatpush2.xpose.msra.mxu0 0.0
    %778 = vmatprep.mubr.f32.mxu0 0.0
    %779 = vmatmul.mubr.f32.gmra.mxu0 %v712
    %v780 = vpop.f32.mrf.mxu0
    %v781 = vadd.f32 %v92, %v780
    %v782 = vpop.f32.mrf.mxu0
    %783 = vdwg.mxu0
    %v784 = vsel %vm210, %v781, -inf
    %785 = vmax.xlane.f32.xlu0 %v784
    %v786 = vpop.xlane.xlu0 %785
    %v787 = vsub.f32 %v781, %v786
    %v788 = vmul.f32 %v787, 1.442695
    %v789 = vpow.pop %v788
    %v790 = vsel %vm210, %v789, 0.0
    %791 = vadd.xlane.f32.xlu0 %v790
    %v792 = vpop.xlane.xlu0 %791
    %v793 = vrcp.pop %v792
    %v794 = vmul.f32 %v789, %v793
    %v796 = vsel %vm210, %v794, 0
    %798 = vmatprep.subr.mxu0 0.0
    %799 = vmatpush1.msra.mxu0 0.0
    %800 = vmatprep.subr.mxu0 0.0
    %801 = vmatpush1.msra.mxu0 0.0
    %802 = vmatprep.subr.mxu0 0.0
    %803 = vmatpush1.msra.mxu0 0.0
    %804 = vmatprep.subr.mxu0 0.0
    %805 = vmatpush1.msra.mxu0 0.0
    %806 = vmatprep.subr.mxu0 0.0
    %807 = vmatpush1.msra.mxu0 0.0
    %808 = vmatprep.subr.mxu0 0.0
    %809 = vmatpush1.msra.mxu0 0.0
    %810 = vmatprep.subr.mxu0 0.0
    %811 = vmatpush1.msra.mxu0 0.0
    %812 = vmatprep.subr.mxu0 0.0
    %813 = vmatpush1.msra.mxu0 0.0
    %814 = vmatprep.subr.mxu0 0.0
    %815 = vmatpush1.msra.mxu0 0.0
    %816 = vmatprep.subr.mxu0 0.0
    %817 = vmatpush1.msra.mxu0 0.0
    %818 = vmatprep.subr.mxu0 0.0
    %819 = vmatpush1.msra.mxu0 0.0
    %820 = vmatprep.subr.mxu0 0.0
    %821 = vmatpush1.msra.mxu0 0.0
    %822 = vmatprep.subr.mxu0 0.0
    %823 = vmatpush1.msra.mxu0 0.0
    %824 = vmatprep.subr.mxu0 0.0
    %825 = vmatpush1.msra.mxu0 0.0
    %826 = vmatprep.subr.mxu0 0.0
    %827 = vmatpush1.msra.mxu0 0.0
    %828 = vmatprep.subr.mxu0 0.0
    %829 = vmatpush1.msra.mxu0 %v629
    %830 = vmatprep.subr.mxu0 0.0
    %831 = vmatpush2.msra.mxu0 0.0
    %832 = vmatprep.subr.mxu0 0.0
    %833 = vmatpush2.msra.mxu0 0.0
    %834 = vmatprep.subr.mxu0 0.0
    %835 = vmatpush2.msra.mxu0 0.0
    %836 = vmatprep.subr.mxu0 0.0
    %837 = vmatpush2.msra.mxu0 0.0
    %838 = vmatprep.subr.mxu0 0.0
    %839 = vmatpush2.msra.mxu0 0.0
    %840 = vmatprep.subr.mxu0 0.0
    %841 = vmatpush2.msra.mxu0 0.0
    %842 = vmatprep.subr.mxu0 0.0
    %843 = vmatpush2.msra.mxu0 0.0
    %844 = vmatprep.subr.mxu0 0.0
    %845 = vmatpush2.msra.mxu0 0.0
    %846 = vmatprep.subr.mxu0 0.0
    %847 = vmatpush2.msra.mxu0 0.0
    %848 = vmatprep.subr.mxu0 0.0
    %849 = vmatpush2.msra.mxu0 0.0
    %850 = vmatprep.subr.mxu0 0.0
    %851 = vmatpush2.msra.mxu0 0.0
    %852 = vmatprep.subr.mxu0 0.0
    %853 = vmatpush2.msra.mxu0 0.0
    %854 = vmatprep.subr.mxu0 0.0
    %855 = vmatpush2.msra.mxu0 0.0
    %856 = vmatprep.subr.mxu0 0.0
    %857 = vmatpush2.msra.mxu0 0.0
    %858 = vmatprep.subr.mxu0 0.0
    %859 = vmatpush2.msra.mxu0 0.0
    %860 = vmatprep.subr.mxu0 0.0
    %861 = vmatpush2.msra.mxu0 0.0
    %862 = vmatprep.mubr.f32.mxu0 0.0
    %863 = vmatmul.mubr.f32.gmra.mxu0 %v796
    %v864 = vpop.f32.mrf.mxu0
    %v865 = vadd.f32 0.0, %v864
    %v866 = vpop.f32.mrf.mxu0
    %867 = vdwg.mxu0
    %869 = vrot.lane.b32.xlu0 %v865, 24
    %v870 = vpop.permute.xlu0 %869
    %vm872 = vcmask 261312
    %873 = vst.msk [vmem:[#allocation2] sm:$0xff] %vm872, %v870
    %875 = vrot.lane.b32.xlu0 %v206, 96
    %v876 = vpop.permute.xlu0 %875
    %v878 = vsel %vm210, %v180, 0
    %v880 = vsel %vm210, %v876, 0
    %882 = vmatprep.subr.mxu0 0.0
    %883 = vmatpush1.xpose.msra.mxu0 0.0
    %884 = vmatprep.subr.mxu0 0.0
    %885 = vmatpush1.xpose.msra.mxu0 0.0
    %886 = vmatprep.subr.mxu0 0.0
    %887 = vmatpush1.xpose.msra.mxu0 0.0
    %888 = vmatprep.subr.mxu0 0.0
    %889 = vmatpush1.xpose.msra.mxu0 0.0
    %890 = vmatprep.subr.mxu0 0.0
    %891 = vmatpush1.xpose.msra.mxu0 0.0
    %892 = vmatprep.subr.mxu0 0.0
    %893 = vmatpush1.xpose.msra.mxu0 0.0
    %894 = vmatprep.subr.mxu0 0.0
    %895 = vmatpush1.xpose.msra.mxu0 0.0
    %896 = vmatprep.subr.mxu0 0.0
    %897 = vmatpush1.xpose.msra.mxu0 0.0
    %898 = vmatprep.subr.mxu0 0.0
    %899 = vmatpush1.xpose.msra.mxu0 0.0
    %900 = vmatprep.subr.mxu0 0.0
    %901 = vmatpush1.xpose.msra.mxu0 0.0
    %902 = vmatprep.subr.mxu0 0.0
    %903 = vmatpush1.xpose.msra.mxu0 0.0
    %904 = vmatprep.subr.mxu0 0.0
    %905 = vmatpush1.xpose.msra.mxu0 0.0
    %906 = vmatprep.subr.mxu0 0.0
    %907 = vmatpush1.xpose.msra.mxu0 0.0
    %908 = vmatprep.subr.mxu0 0.0
    %909 = vmatpush1.xpose.msra.mxu0 0.0
    %910 = vmatprep.subr.mxu0 0.0
    %911 = vmatpush1.xpose.msra.mxu0 0.0
    %912 = vmatprep.subr.mxu0 0.0
    %913 = vmatpush1.xpose.msra.mxu0 %v880
    %914 = vmatprep.subr.mxu0 0.0
    %915 = vmatpush2.xpose.msra.mxu0 0.0
    %916 = vmatprep.subr.mxu0 0.0
    %917 = vmatpush2.xpose.msra.mxu0 0.0
    %918 = vmatprep.subr.mxu0 0.0
    %919 = vmatpush2.xpose.msra.mxu0 0.0
    %920 = vmatprep.subr.mxu0 0.0
    %921 = vmatpush2.xpose.msra.mxu0 0.0
    %922 = vmatprep.subr.mxu0 0.0
    %923 = vmatpush2.xpose.msra.mxu0 0.0
    %924 = vmatprep.subr.mxu0 0.0
    %925 = vmatpush2.xpose.msra.mxu0 0.0
    %926 = vmatprep.subr.mxu0 0.0
    %927 = vmatpush2.xpose.msra.mxu0 0.0
    %928 = vmatprep.subr.mxu0 0.0
    %929 = vmatpush2.xpose.msra.mxu0 0.0
    %930 = vmatprep.subr.mxu0 0.0
    %931 = vmatpush2.xpose.msra.mxu0 0.0
    %932 = vmatprep.subr.mxu0 0.0
    %933 = vmatpush2.xpose.msra.mxu0 0.0
    %934 = vmatprep.subr.mxu0 0.0
    %935 = vmatpush2.xpose.msra.mxu0 0.0
    %936 = vmatprep.subr.mxu0 0.0
    %937 = vmatpush2.xpose.msra.mxu0 0.0
    %938 = vmatprep.subr.mxu0 0.0
    %939 = vmatpush2.xpose.msra.mxu0 0.0
    %940 = vmatprep.subr.mxu0 0.0
    %941 = vmatpush2.xpose.msra.mxu0 0.0
    %942 = vmatprep.subr.mxu0 0.0
    %943 = vmatpush2.xpose.msra.mxu0 0.0
    %944 = vmatprep.subr.mxu0 0.0
    %945 = vmatpush2.xpose.msra.mxu0 0.0
    %946 = vmatprep.mubr.f32.mxu0 0.0
    %947 = vmatmul.mubr.f32.gmra.mxu0 %v878
    %v948 = vpop.f32.mrf.mxu0
    %v949 = vadd.f32 %v92, %v948
    %v950 = vpop.f32.mrf.mxu0
    %951 = vdwg.mxu0
    %v952 = vsel %vm210, %v949, -inf
    %953 = vmax.xlane.f32.xlu0 %v952
    %v954 = vpop.xlane.xlu0 %953
    %v955 = vsub.f32 %v949, %v954
    %v956 = vmul.f32 %v955, 1.442695
    %v957 = vpow.pop %v956
    %v958 = vsel %vm210, %v957, 0.0
    %959 = vadd.xlane.f32.xlu0 %v958
    %v960 = vpop.xlane.xlu0 %959
    %v961 = vrcp.pop %v960
    %v962 = vmul.f32 %v957, %v961
    %964 = vrot.lane.b32.xlu0 %v156, 80
    %v965 = vpop.permute.xlu0 %964
    %v968 = vsel %vm210, %v962, 0
    %970 = vmatprep.subr.mxu0 0.0
    %971 = vmatpush1.msra.mxu0 0.0
    %972 = vmatprep.subr.mxu0 0.0
    %973 = vmatpush1.msra.mxu0 0.0
    %974 = vmatprep.subr.mxu0 0.0
    %975 = vmatpush1.msra.mxu0 0.0
    %976 = vmatprep.subr.mxu0 0.0
    %977 = vmatpush1.msra.mxu0 0.0
    %978 = vmatprep.subr.mxu0 0.0
    %979 = vmatpush1.msra.mxu0 0.0
    %980 = vmatprep.subr.mxu0 0.0
    %981 = vmatpush1.msra.mxu0 0.0
    %982 = vmatprep.subr.mxu0 0.0
    %983 = vmatpush1.msra.mxu0 0.0
    %984 = vmatprep.subr.mxu0 0.0
    %985 = vmatpush1.msra.mxu0 0.0
    %986 = vmatprep.subr.mxu0 0.0
    %987 = vmatpush1.msra.mxu0 0.0
    %988 = vmatprep.subr.mxu0 0.0
    %989 = vmatpush1.msra.mxu0 0.0
    %990 = vmatprep.subr.mxu0 0.0
    %991 = vmatpush1.msra.mxu0 0.0
    %992 = vmatprep.subr.mxu0 0.0
    %993 = vmatpush1.msra.mxu0 0.0
    %994 = vmatprep.subr.mxu0 0.0
    %995 = vmatpush1.msra.mxu0 0.0
    %996 = vmatprep.subr.mxu0 0.0
    %997 = vmatpush1.msra.mxu0 0.0
    %998 = vmatprep.subr.mxu0 0.0
    %999 = vmatpush1.msra.mxu0 0.0
    %1000 = vmatprep.subr.mxu0 0.0
    %1001 = vmatpush1.msra.mxu0 %v965
    %1002 = vmatprep.subr.mxu0 0.0
    %1003 = vmatpush2.msra.mxu0 0.0
    %1004 = vmatprep.subr.mxu0 0.0
    %1005 = vmatpush2.msra.mxu0 0.0
    %1006 = vmatprep.subr.mxu0 0.0
    %1007 = vmatpush2.msra.mxu0 0.0
    %1008 = vmatprep.subr.mxu0 0.0
    %1009 = vmatpush2.msra.mxu0 0.0
    %1010 = vmatprep.subr.mxu0 0.0
    %1011 = vmatpush2.msra.mxu0 0.0
    %1012 = vmatprep.subr.mxu0 0.0
    %1013 = vmatpush2.msra.mxu0 0.0
    %1014 = vmatprep.subr.mxu0 0.0
    %1015 = vmatpush2.msra.mxu0 0.0
    %1016 = vmatprep.subr.mxu0 0.0
    %1017 = vmatpush2.msra.mxu0 0.0
    %1018 = vmatprep.subr.mxu0 0.0
    %1019 = vmatpush2.msra.mxu0 0.0
    %1020 = vmatprep.subr.mxu0 0.0
    %1021 = vmatpush2.msra.mxu0 0.0
    %1022 = vmatprep.subr.mxu0 0.0
    %1023 = vmatpush2.msra.mxu0 0.0
    %1024 = vmatprep.subr.mxu0 0.0
    %1025 = vmatpush2.msra.mxu0 0.0
    %1026 = vmatprep.subr.mxu0 0.0
    %1027 = vmatpush2.msra.mxu0 0.0
    %1028 = vmatprep.subr.mxu0 0.0
    %1029 = vmatpush2.msra.mxu0 0.0
    %1030 = vmatprep.subr.mxu0 0.0
    %1031 = vmatpush2.msra.mxu0 0.0
    %1032 = vmatprep.subr.mxu0 0.0
    %1033 = vmatpush2.msra.mxu0 0.0
    %1034 = vmatprep.mubr.f32.mxu0 0.0
    %1035 = vmatmul.mubr.f32.gmra.mxu0 %v968
    %v1036 = vpop.f32.mrf.mxu0
    %v1037 = vadd.f32 0.0, %v1036
    %v1038 = vpop.f32.mrf.mxu0
    %1039 = vdwg.mxu0
    %1040 = vst.msk [vmem:[#allocation2 + $0x8] sm:$0xff] %vm210, %v1037
    %1041 = vrot.lane.b32.xlu0 %v180, 120
    %v1042 = vpop.permute.xlu0 %1041
    %v1043 = vsel %vm210, %v1042, 0
    %1045 = vmatprep.subr.mxu0 0.0
    %1046 = vmatpush1.xpose.msra.mxu0 0.0
    %1047 = vmatprep.subr.mxu0 0.0
    %1048 = vmatpush1.xpose.msra.mxu0 0.0
    %1049 = vmatprep.subr.mxu0 0.0
    %1050 = vmatpush1.xpose.msra.mxu0 0.0
    %1051 = vmatprep.subr.mxu0 0.0
    %1052 = vmatpush1.xpose.msra.mxu0 0.0
    %1053 = vmatprep.subr.mxu0 0.0
    %1054 = vmatpush1.xpose.msra.mxu0 0.0
    %1055 = vmatprep.subr.mxu0 0.0
    %1056 = vmatpush1.xpose.msra.mxu0 0.0
    %1057 = vmatprep.subr.mxu0 0.0
    %1058 = vmatpush1.xpose.msra.mxu0 0.0
    %1059 = vmatprep.subr.mxu0 0.0
    %1060 = vmatpush1.xpose.msra.mxu0 0.0
    %1061 = vmatprep.subr.mxu0 0.0
    %1062 = vmatpush1.xpose.msra.mxu0 0.0
    %1063 = vmatprep.subr.mxu0 0.0
    %1064 = vmatpush1.xpose.msra.mxu0 0.0
    %1065 = vmatprep.subr.mxu0 0.0
    %1066 = vmatpush1.xpose.msra.mxu0 0.0
    %1067 = vmatprep.subr.mxu0 0.0
    %1068 = vmatpush1.xpose.msra.mxu0 0.0
    %1069 = vmatprep.subr.mxu0 0.0
    %1070 = vmatpush1.xpose.msra.mxu0 0.0
    %1071 = vmatprep.subr.mxu0 0.0
    %1072 = vmatpush1.xpose.msra.mxu0 0.0
    %1073 = vmatprep.subr.mxu0 0.0
    %1074 = vmatpush1.xpose.msra.mxu0 0.0
    %1075 = vmatprep.subr.mxu0 0.0
    %1076 = vmatpush1.xpose.msra.mxu0 %v880
    %1077 = vmatprep.subr.mxu0 0.0
    %1078 = vmatpush2.xpose.msra.mxu0 0.0
    %1079 = vmatprep.subr.mxu0 0.0
    %1080 = vmatpush2.xpose.msra.mxu0 0.0
    %1081 = vmatprep.subr.mxu0 0.0
    %1082 = vmatpush2.xpose.msra.mxu0 0.0
    %1083 = vmatprep.subr.mxu0 0.0
    %1084 = vmatpush2.xpose.msra.mxu0 0.0
    %1085 = vmatprep.subr.mxu0 0.0
    %1086 = vmatpush2.xpose.msra.mxu0 0.0
    %1087 = vmatprep.subr.mxu0 0.0
    %1088 = vmatpush2.xpose.msra.mxu0 0.0
    %1089 = vmatprep.subr.mxu0 0.0
    %1090 = vmatpush2.xpose.msra.mxu0 0.0
    %1091 = vmatprep.subr.mxu0 0.0
    %1092 = vmatpush2.xpose.msra.mxu0 0.0
    %1093 = vmatprep.subr.mxu0 0.0
    %1094 = vmatpush2.xpose.msra.mxu0 0.0
    %1095 = vmatprep.subr.mxu0 0.0
    %1096 = vmatpush2.xpose.msra.mxu0 0.0
    %1097 = vmatprep.subr.mxu0 0.0
    %1098 = vmatpush2.xpose.msra.mxu0 0.0
    %1099 = vmatprep.subr.mxu0 0.0
    %1100 = vmatpush2.xpose.msra.mxu0 0.0
    %1101 = vmatprep.subr.mxu0 0.0
    %1102 = vmatpush2.xpose.msra.mxu0 0.0
    %1103 = vmatprep.subr.mxu0 0.0
    %1104 = vmatpush2.xpose.msra.mxu0 0.0
    %1105 = vmatprep.subr.mxu0 0.0
    %1106 = vmatpush2.xpose.msra.mxu0 0.0
    %1107 = vmatprep.subr.mxu0 0.0
    %1108 = vmatpush2.xpose.msra.mxu0 0.0
    %1109 = vmatprep.mubr.f32.mxu0 0.0
    %1110 = vmatmul.mubr.f32.gmra.mxu0 %v1043
    %v1111 = vpop.f32.mrf.mxu0
    %v1112 = vadd.f32 %v92, %v1111
    %v1113 = vpop.f32.mrf.mxu0
    %1114 = vdwg.mxu0
    %v1115 = vsel %vm210, %v1112, -inf
    %1116 = vmax.xlane.f32.xlu0 %v1115
    %v1117 = vpop.xlane.xlu0 %1116
    %v1118 = vsub.f32 %v1112, %v1117
    %v1119 = vmul.f32 %v1118, 1.442695
    %v1120 = vpow.pop %v1119
    %v1121 = vsel %vm210, %v1120, 0.0
    %1122 = vadd.xlane.f32.xlu0 %v1121
    %v1123 = vpop.xlane.xlu0 %1122
    %v1124 = vrcp.pop %v1123
    %v1125 = vmul.f32 %v1120, %v1124
    %v1127 = vsel %vm210, %v1125, 0
    %1129 = vmatprep.subr.mxu0 0.0
    %1130 = vmatpush1.msra.mxu0 0.0
    %1131 = vmatprep.subr.mxu0 0.0
    %1132 = vmatpush1.msra.mxu0 0.0
    %1133 = vmatprep.subr.mxu0 0.0
    %1134 = vmatpush1.msra.mxu0 0.0
    %1135 = vmatprep.subr.mxu0 0.0
    %1136 = vmatpush1.msra.mxu0 0.0
    %1137 = vmatprep.subr.mxu0 0.0
    %1138 = vmatpush1.msra.mxu0 0.0
    %1139 = vmatprep.subr.mxu0 0.0
    %1140 = vmatpush1.msra.mxu0 0.0
    %1141 = vmatprep.subr.mxu0 0.0
    %1142 = vmatpush1.msra.mxu0 0.0
    %1143 = vmatprep.subr.mxu0 0.0
    %1144 = vmatpush1.msra.mxu0 0.0
    %1145 = vmatprep.subr.mxu0 0.0
    %1146 = vmatpush1.msra.mxu0 0.0
    %1147 = vmatprep.subr.mxu0 0.0
    %1148 = vmatpush1.msra.mxu0 0.0
    %1149 = vmatprep.subr.mxu0 0.0
    %1150 = vmatpush1.msra.mxu0 0.0
    %1151 = vmatprep.subr.mxu0 0.0
    %1152 = vmatpush1.msra.mxu0 0.0
    %1153 = vmatprep.subr.mxu0 0.0
    %1154 = vmatpush1.msra.mxu0 0.0
    %1155 = vmatprep.subr.mxu0 0.0
    %1156 = vmatpush1.msra.mxu0 0.0
    %1157 = vmatprep.subr.mxu0 0.0
    %1158 = vmatpush1.msra.mxu0 0.0
    %1159 = vmatprep.subr.mxu0 0.0
    %1160 = vmatpush1.msra.mxu0 %v965
    %1161 = vmatprep.subr.mxu0 0.0
    %1162 = vmatpush2.msra.mxu0 0.0
    %1163 = vmatprep.subr.mxu0 0.0
    %1164 = vmatpush2.msra.mxu0 0.0
    %1165 = vmatprep.subr.mxu0 0.0
    %1166 = vmatpush2.msra.mxu0 0.0
    %1167 = vmatprep.subr.mxu0 0.0
    %1168 = vmatpush2.msra.mxu0 0.0
    %1169 = vmatprep.subr.mxu0 0.0
    %1170 = vmatpush2.msra.mxu0 0.0
    %1171 = vmatprep.subr.mxu0 0.0
    %1172 = vmatpush2.msra.mxu0 0.0
    %1173 = vmatprep.subr.mxu0 0.0
    %1174 = vmatpush2.msra.mxu0 0.0
    %1175 = vmatprep.subr.mxu0 0.0
    %1176 = vmatpush2.msra.mxu0 0.0
    %1177 = vmatprep.subr.mxu0 0.0
    %1178 = vmatpush2.msra.mxu0 0.0
    %1179 = vmatprep.subr.mxu0 0.0
    %1180 = vmatpush2.msra.mxu0 0.0
    %1181 = vmatprep.subr.mxu0 0.0
    %1182 = vmatpush2.msra.mxu0 0.0
    %1183 = vmatprep.subr.mxu0 0.0
    %1184 = vmatpush2.msra.mxu0 0.0
    %1185 = vmatprep.subr.mxu0 0.0
    %1186 = vmatpush2.msra.mxu0 0.0
    %1187 = vmatprep.subr.mxu0 0.0
    %1188 = vmatpush2.msra.mxu0 0.0
    %1189 = vmatprep.subr.mxu0 0.0
    %1190 = vmatpush2.msra.mxu0 0.0
    %1191 = vmatprep.subr.mxu0 0.0
    %1192 = vmatpush2.msra.mxu0 0.0
    %1193 = vmatprep.mubr.f32.mxu0 0.0
    %1194 = vmatmul.mubr.f32.gmra.mxu0 %v1127
    %v1195 = vpop.f32.mrf.mxu0
    %v1196 = vadd.f32 0.0, %v1195
    %v1197 = vpop.f32.mrf.mxu0
    %1198 = vdwg.mxu0
    %1200 = vrot.lane.b32.xlu0 %v1196, 8
    %v1201 = vpop.permute.xlu0 %1200
    %1203 = vst.msk [vmem:[#allocation2 + $0x8] sm:$0xff] %vm537, %v1201
    %1204 = vrot.lane.b32.xlu0 %v180, 112
    %v1205 = vpop.permute.xlu0 %1204
    %1206 = vrot.lane.b32.xlu0 %v206, 88
    %v1207 = vpop.permute.xlu0 %1206
    %v1208 = vsel %vm210, %v1205, 0
    %v1210 = vsel %vm210, %v1207, 0
    %1212 = vmatprep.subr.mxu0 0.0
    %1213 = vmatpush1.xpose.msra.mxu0 0.0
    %1214 = vmatprep.subr.mxu0 0.0
    %1215 = vmatpush1.xpose.msra.mxu0 0.0
    %1216 = vmatprep.subr.mxu0 0.0
    %1217 = vmatpush1.xpose.msra.mxu0 0.0
    %1218 = vmatprep.subr.mxu0 0.0
    %1219 = vmatpush1.xpose.msra.mxu0 0.0
    %1220 = vmatprep.subr.mxu0 0.0
    %1221 = vmatpush1.xpose.msra.mxu0 0.0
    %1222 = vmatprep.subr.mxu0 0.0
    %1223 = vmatpush1.xpose.msra.mxu0 0.0
    %1224 = vmatprep.subr.mxu0 0.0
    %1225 = vmatpush1.xpose.msra.mxu0 0.0
    %1226 = vmatprep.subr.mxu0 0.0
    %1227 = vmatpush1.xpose.msra.mxu0 0.0
    %1228 = vmatprep.subr.mxu0 0.0
    %1229 = vmatpush1.xpose.msra.mxu0 0.0
    %1230 = vmatprep.subr.mxu0 0.0
    %1231 = vmatpush1.xpose.msra.mxu0 0.0
    %1232 = vmatprep.subr.mxu0 0.0
    %1233 = vmatpush1.xpose.msra.mxu0 0.0
    %1234 = vmatprep.subr.mxu0 0.0
    %1235 = vmatpush1.xpose.msra.mxu0 0.0
    %1236 = vmatprep.subr.mxu0 0.0
    %1237 = vmatpush1.xpose.msra.mxu0 0.0
    %1238 = vmatprep.subr.mxu0 0.0
    %1239 = vmatpush1.xpose.msra.mxu0 0.0
    %1240 = vmatprep.subr.mxu0 0.0
    %1241 = vmatpush1.xpose.msra.mxu0 0.0
    %1242 = vmatprep.subr.mxu0 0.0
    %1243 = vmatpush1.xpose.msra.mxu0 %v1210
    %1244 = vmatprep.subr.mxu0 0.0
    %1245 = vmatpush2.xpose.msra.mxu0 0.0
    %1246 = vmatprep.subr.mxu0 0.0
    %1247 = vmatpush2.xpose.msra.mxu0 0.0
    %1248 = vmatprep.subr.mxu0 0.0
    %1249 = vmatpush2.xpose.msra.mxu0 0.0
    %1250 = vmatprep.subr.mxu0 0.0
    %1251 = vmatpush2.xpose.msra.mxu0 0.0
    %1252 = vmatprep.subr.mxu0 0.0
    %1253 = vmatpush2.xpose.msra.mxu0 0.0
    %1254 = vmatprep.subr.mxu0 0.0
    %1255 = vmatpush2.xpose.msra.mxu0 0.0
    %1256 = vmatprep.subr.mxu0 0.0
    %1257 = vmatpush2.xpose.msra.mxu0 0.0
    %1258 = vmatprep.subr.mxu0 0.0
    %1259 = vmatpush2.xpose.msra.mxu0 0.0
    %1260 = vmatprep.subr.mxu0 0.0
    %1261 = vmatpush2.xpose.msra.mxu0 0.0
    %1262 = vmatprep.subr.mxu0 0.0
    %1263 = vmatpush2.xpose.msra.mxu0 0.0
    %1264 = vmatprep.subr.mxu0 0.0
    %1265 = vmatpush2.xpose.msra.mxu0 0.0
    %1266 = vmatprep.subr.mxu0 0.0
    %1267 = vmatpush2.xpose.msra.mxu0 0.0
    %1268 = vmatprep.subr.mxu0 0.0
    %1269 = vmatpush2.xpose.msra.mxu0 0.0
    %1270 = vmatprep.subr.mxu0 0.0
    %1271 = vmatpush2.xpose.msra.mxu0 0.0
    %1272 = vmatprep.subr.mxu0 0.0
    %1273 = vmatpush2.xpose.msra.mxu0 0.0
    %1274 = vmatprep.subr.mxu0 0.0
    %1275 = vmatpush2.xpose.msra.mxu0 0.0
    %1276 = vmatprep.mubr.f32.mxu0 0.0
    %1277 = vmatmul.mubr.f32.gmra.mxu0 %v1208
    %v1278 = vpop.f32.mrf.mxu0
    %v1279 = vadd.f32 %v92, %v1278
    %v1280 = vpop.f32.mrf.mxu0
    %1281 = vdwg.mxu0
    %v1282 = vsel %vm210, %v1279, -inf
    %1283 = vmax.xlane.f32.xlu0 %v1282
    %v1284 = vpop.xlane.xlu0 %1283
    %v1285 = vsub.f32 %v1279, %v1284
    %v1286 = vmul.f32 %v1285, 1.442695
    %v1287 = vpow.pop %v1286
    %v1288 = vsel %vm210, %v1287, 0.0
    %1289 = vadd.xlane.f32.xlu0 %v1288
    %v1290 = vpop.xlane.xlu0 %1289
    %v1291 = vrcp.pop %v1290
    %v1292 = vmul.f32 %v1287, %v1291
    %1293 = vrot.lane.b32.xlu0 %v156, 72
    %v1294 = vpop.permute.xlu0 %1293
    %v1297 = vsel %vm210, %v1292, 0
    %1299 = vmatprep.subr.mxu0 0.0
    %1300 = vmatpush1.msra.mxu0 0.0
    %1301 = vmatprep.subr.mxu0 0.0
    %1302 = vmatpush1.msra.mxu0 0.0
    %1303 = vmatprep.subr.mxu0 0.0
    %1304 = vmatpush1.msra.mxu0 0.0
    %1305 = vmatprep.subr.mxu0 0.0
    %1306 = vmatpush1.msra.mxu0 0.0
    %1307 = vmatprep.subr.mxu0 0.0
    %1308 = vmatpush1.msra.mxu0 0.0
    %1309 = vmatprep.subr.mxu0 0.0
    %1310 = vmatpush1.msra.mxu0 0.0
    %1311 = vmatprep.subr.mxu0 0.0
    %1312 = vmatpush1.msra.mxu0 0.0
    %1313 = vmatprep.subr.mxu0 0.0
    %1314 = vmatpush1.msra.mxu0 0.0
    %1315 = vmatprep.subr.mxu0 0.0
    %1316 = vmatpush1.msra.mxu0 0.0
    %1317 = vmatprep.subr.mxu0 0.0
    %1318 = vmatpush1.msra.mxu0 0.0
    %1319 = vmatprep.subr.mxu0 0.0
    %1320 = vmatpush1.msra.mxu0 0.0
    %1321 = vmatprep.subr.mxu0 0.0
    %1322 = vmatpush1.msra.mxu0 0.0
    %1323 = vmatprep.subr.mxu0 0.0
    %1324 = vmatpush1.msra.mxu0 0.0
    %1325 = vmatprep.subr.mxu0 0.0
    %1326 = vmatpush1.msra.mxu0 0.0
    %1327 = vmatprep.subr.mxu0 0.0
    %1328 = vmatpush1.msra.mxu0 0.0
    %1329 = vmatprep.subr.mxu0 0.0
    %1330 = vmatpush1.msra.mxu0 %v1294
    %1331 = vmatprep.subr.mxu0 0.0
    %1332 = vmatpush2.msra.mxu0 0.0
    %1333 = vmatprep.subr.mxu0 0.0
    %1334 = vmatpush2.msra.mxu0 0.0
    %1335 = vmatprep.subr.mxu0 0.0
    %1336 = vmatpush2.msra.mxu0 0.0
    %1337 = vmatprep.subr.mxu0 0.0
    %1338 = vmatpush2.msra.mxu0 0.0
    %1339 = vmatprep.subr.mxu0 0.0
    %1340 = vmatpush2.msra.mxu0 0.0
    %1341 = vmatprep.subr.mxu0 0.0
    %1342 = vmatpush2.msra.mxu0 0.0
    %1343 = vmatprep.subr.mxu0 0.0
    %1344 = vmatpush2.msra.mxu0 0.0
    %1345 = vmatprep.subr.mxu0 0.0
    %1346 = vmatpush2.msra.mxu0 0.0
    %1347 = vmatprep.subr.mxu0 0.0
    %1348 = vmatpush2.msra.mxu0 0.0
    %1349 = vmatprep.subr.mxu0 0.0
    %1350 = vmatpush2.msra.mxu0 0.0
    %1351 = vmatprep.subr.mxu0 0.0
    %1352 = vmatpush2.msra.mxu0 0.0
    %1353 = vmatprep.subr.mxu0 0.0
    %1354 = vmatpush2.msra.mxu0 0.0
    %1355 = vmatprep.subr.mxu0 0.0
    %1356 = vmatpush2.msra.mxu0 0.0
    %1357 = vmatprep.subr.mxu0 0.0
    %1358 = vmatpush2.msra.mxu0 0.0
    %1359 = vmatprep.subr.mxu0 0.0
    %1360 = vmatpush2.msra.mxu0 0.0
    %1361 = vmatprep.subr.mxu0 0.0
    %1362 = vmatpush2.msra.mxu0 0.0
    %1363 = vmatprep.mubr.f32.mxu0 0.0
    %1364 = vmatmul.mubr.f32.gmra.mxu0 %v1297
    %v1365 = vpop.f32.mrf.mxu0
    %v1366 = vadd.f32 0.0, %v1365
    %v1367 = vpop.f32.mrf.mxu0
    %1368 = vdwg.mxu0
    %1370 = vrot.lane.b32.xlu0 %v1366, 16
    %v1371 = vpop.permute.xlu0 %1370
    %1373 = vst.msk [vmem:[#allocation2 + $0x8] sm:$0xff] %vm708, %v1371
    %1374 = vrot.lane.b32.xlu0 %v180, 104
    %v1375 = vpop.permute.xlu0 %1374
    %v1376 = vsel %vm210, %v1375, 0
    %1378 = vmatprep.subr.mxu0 0.0
    %1379 = vmatpush1.xpose.msra.mxu0 0.0
    %1380 = vmatprep.subr.mxu0 0.0
    %1381 = vmatpush1.xpose.msra.mxu0 0.0
    %1382 = vmatprep.subr.mxu0 0.0
    %1383 = vmatpush1.xpose.msra.mxu0 0.0
    %1384 = vmatprep.subr.mxu0 0.0
    %1385 = vmatpush1.xpose.msra.mxu0 0.0
    %1386 = vmatprep.subr.mxu0 0.0
    %1387 = vmatpush1.xpose.msra.mxu0 0.0
    %1388 = vmatprep.subr.mxu0 0.0
    %1389 = vmatpush1.xpose.msra.mxu0 0.0
    %1390 = vmatprep.subr.mxu0 0.0
    %1391 = vmatpush1.xpose.msra.mxu0 0.0
    %1392 = vmatprep.subr.mxu0 0.0
    %1393 = vmatpush1.xpose.msra.mxu0 0.0
    %1394 = vmatprep.subr.mxu0 0.0
    %1395 = vmatpush1.xpose.msra.mxu0 0.0
    %1396 = vmatprep.subr.mxu0 0.0
    %1397 = vmatpush1.xpose.msra.mxu0 0.0
    %1398 = vmatprep.subr.mxu0 0.0
    %1399 = vmatpush1.xpose.msra.mxu0 0.0
    %1400 = vmatprep.subr.mxu0 0.0
    %1401 = vmatpush1.xpose.msra.mxu0 0.0
    %1402 = vmatprep.subr.mxu0 0.0
    %1403 = vmatpush1.xpose.msra.mxu0 0.0
    %1404 = vmatprep.subr.mxu0 0.0
    %1405 = vmatpush1.xpose.msra.mxu0 0.0
    %1406 = vmatprep.subr.mxu0 0.0
    %1407 = vmatpush1.xpose.msra.mxu0 0.0
    %1408 = vmatprep.subr.mxu0 0.0
    %1409 = vmatpush1.xpose.msra.mxu0 %v1210
    %1410 = vmatprep.subr.mxu0 0.0
    %1411 = vmatpush2.xpose.msra.mxu0 0.0
    %1412 = vmatprep.subr.mxu0 0.0
    %1413 = vmatpush2.xpose.msra.mxu0 0.0
    %1414 = vmatprep.subr.mxu0 0.0
    %1415 = vmatpush2.xpose.msra.mxu0 0.0
    %1416 = vmatprep.subr.mxu0 0.0
    %1417 = vmatpush2.xpose.msra.mxu0 0.0
    %1418 = vmatprep.subr.mxu0 0.0
    %1419 = vmatpush2.xpose.msra.mxu0 0.0
    %1420 = vmatprep.subr.mxu0 0.0
    %1421 = vmatpush2.xpose.msra.mxu0 0.0
    %1422 = vmatprep.subr.mxu0 0.0
    %1423 = vmatpush2.xpose.msra.mxu0 0.0
    %1424 = vmatprep.subr.mxu0 0.0
    %1425 = vmatpush2.xpose.msra.mxu0 0.0
    %1426 = vmatprep.subr.mxu0 0.0
    %1427 = vmatpush2.xpose.msra.mxu0 0.0
    %1428 = vmatprep.subr.mxu0 0.0
    %1429 = vmatpush2.xpose.msra.mxu0 0.0
    %1430 = vmatprep.subr.mxu0 0.0
    %1431 = vmatpush2.xpose.msra.mxu0 0.0
    %1432 = vmatprep.subr.mxu0 0.0
    %1433 = vmatpush2.xpose.msra.mxu0 0.0
    %1434 = vmatprep.subr.mxu0 0.0
    %1435 = vmatpush2.xpose.msra.mxu0 0.0
    %1436 = vmatprep.subr.mxu0 0.0
    %1437 = vmatpush2.xpose.msra.mxu0 0.0
    %1438 = vmatprep.subr.mxu0 0.0
    %1439 = vmatpush2.xpose.msra.mxu0 0.0
    %1440 = vmatprep.subr.mxu0 0.0
    %1441 = vmatpush2.xpose.msra.mxu0 0.0
    %1442 = vmatprep.mubr.f32.mxu0 0.0
    %1443 = vmatmul.mubr.f32.gmra.mxu0 %v1376
    %v1444 = vpop.f32.mrf.mxu0
    %v1445 = vadd.f32 %v92, %v1444
    %v1446 = vpop.f32.mrf.mxu0
    %1447 = vdwg.mxu0
    %v1448 = vsel %vm210, %v1445, -inf
    %1449 = vmax.xlane.f32.xlu0 %v1448
    %v1450 = vpop.xlane.xlu0 %1449
    %v1451 = vsub.f32 %v1445, %v1450
    %v1452 = vmul.f32 %v1451, 1.442695
    %v1453 = vpow.pop %v1452
    %v1454 = vsel %vm210, %v1453, 0.0
    %1455 = vadd.xlane.f32.xlu0 %v1454
    %v1456 = vpop.xlane.xlu0 %1455
    %v1457 = vrcp.pop %v1456
    %v1458 = vmul.f32 %v1453, %v1457
    %v1460 = vsel %vm210, %v1458, 0
    %1462 = vmatprep.subr.mxu0 0.0
    %1463 = vmatpush1.msra.mxu0 0.0
    %1464 = vmatprep.subr.mxu0 0.0
    %1465 = vmatpush1.msra.mxu0 0.0
    %1466 = vmatprep.subr.mxu0 0.0
    %1467 = vmatpush1.msra.mxu0 0.0
    %1468 = vmatprep.subr.mxu0 0.0
    %1469 = vmatpush1.msra.mxu0 0.0
    %1470 = vmatprep.subr.mxu0 0.0
    %1471 = vmatpush1.msra.mxu0 0.0
    %1472 = vmatprep.subr.mxu0 0.0
    %1473 = vmatpush1.msra.mxu0 0.0
    %1474 = vmatprep.subr.mxu0 0.0
    %1475 = vmatpush1.msra.mxu0 0.0
    %1476 = vmatprep.subr.mxu0 0.0
    %1477 = vmatpush1.msra.mxu0 0.0
    %1478 = vmatprep.subr.mxu0 0.0
    %1479 = vmatpush1.msra.mxu0 0.0
    %1480 = vmatprep.subr.mxu0 0.0
    %1481 = vmatpush1.msra.mxu0 0.0
    %1482 = vmatprep.subr.mxu0 0.0
    %1483 = vmatpush1.msra.mxu0 0.0
    %1484 = vmatprep.subr.mxu0 0.0
    %1485 = vmatpush1.msra.mxu0 0.0
    %1486 = vmatprep.subr.mxu0 0.0
    %1487 = vmatpush1.msra.mxu0 0.0
    %1488 = vmatprep.subr.mxu0 0.0
    %1489 = vmatpush1.msra.mxu0 0.0
    %1490 = vmatprep.subr.mxu0 0.0
    %1491 = vmatpush1.msra.mxu0 0.0
    %1492 = vmatprep.subr.mxu0 0.0
    %1493 = vmatpush1.msra.mxu0 %v1294
    %1494 = vmatprep.subr.mxu0 0.0
    %1495 = vmatpush2.msra.mxu0 0.0
    %1496 = vmatprep.subr.mxu0 0.0
    %1497 = vmatpush2.msra.mxu0 0.0
    %1498 = vmatprep.subr.mxu0 0.0
    %1499 = vmatpush2.msra.mxu0 0.0
    %1500 = vmatprep.subr.mxu0 0.0
    %1501 = vmatpush2.msra.mxu0 0.0
    %1502 = vmatprep.subr.mxu0 0.0
    %1503 = vmatpush2.msra.mxu0 0.0
    %1504 = vmatprep.subr.mxu0 0.0
    %1505 = vmatpush2.msra.mxu0 0.0
    %1506 = vmatprep.subr.mxu0 0.0
    %1507 = vmatpush2.msra.mxu0 0.0
    %1508 = vmatprep.subr.mxu0 0.0
    %1509 = vmatpush2.msra.mxu0 0.0
    %1510 = vmatprep.subr.mxu0 0.0
    %1511 = vmatpush2.msra.mxu0 0.0
    %1512 = vmatprep.subr.mxu0 0.0
    %1513 = vmatpush2.msra.mxu0 0.0
    %1514 = vmatprep.subr.mxu0 0.0
    %1515 = vmatpush2.msra.mxu0 0.0
    %1516 = vmatprep.subr.mxu0 0.0
    %1517 = vmatpush2.msra.mxu0 0.0
    %1518 = vmatprep.subr.mxu0 0.0
    %1519 = vmatpush2.msra.mxu0 0.0
    %1520 = vmatprep.subr.mxu0 0.0
    %1521 = vmatpush2.msra.mxu0 0.0
    %1522 = vmatprep.subr.mxu0 0.0
    %1523 = vmatpush2.msra.mxu0 0.0
    %1524 = vmatprep.subr.mxu0 0.0
    %1525 = vmatpush2.msra.mxu0 0.0
    %1526 = vmatprep.mubr.f32.mxu0 0.0
    %1527 = vmatmul.mubr.f32.gmra.mxu0 %v1460
    %v1528 = vpop.f32.mrf.mxu0
    %v1529 = vadd.f32 0.0, %v1528
    %v1530 = vpop.f32.mrf.mxu0
    %1531 = vdwg.mxu0
    %1533 = vrot.lane.b32.xlu0 %v1529, 24
    %v1534 = vpop.permute.xlu0 %1533
    %1536 = vst.msk [vmem:[#allocation2 + $0x8] sm:$0xff] %vm872, %v1534
    %v1537 = vld [vmem:[#allocation2] sm:$0xff]
    %v1538 = vld [vmem:[#allocation2 + $0x8] sm:$0xff]
    %v1539 = vpack.c.bf16 %v1538, %v1537
    %v1540 = vld [vmem:[#allocation11] sm:$0xf]
    %v1541 = vld [vmem:[#allocation11 + $0x4] sm:$0xf]
    %v1542 = vld [vmem:[#allocation11 + $0x8] sm:$0xf]
    %v1543 = vld [vmem:[#allocation11 + $0xc] sm:$0xf]
    %v1548 = vunpack.c.l.b16 %v1540
    %v1549 = vunpack.c.l.b16 %v1541
    %v1550 = vunpack.c.l.b16 %v1542
    %v1551 = vunpack.c.l.b16 %v1543
    %v1552 = vpack.c.b16 %v1549, %v1548
    %v1553 = vpack.c.b16 %v1551, %v1550
    %v1557 = vsel %vm114, %v1539, 0
    %1559 = vmatprep.subr.bf16.mxu0 0
    %1560 = vmatpush1.bf16.msra.mxu0 0
    %1561 = vmatprep.subr.bf16.mxu0 0
    %1562 = vmatpush1.bf16.msra.mxu0 0
    %1563 = vmatprep.subr.bf16.mxu0 0
    %1564 = vmatpush1.bf16.msra.mxu0 0
    %1565 = vmatprep.subr.bf16.mxu0 0
    %1566 = vmatpush1.bf16.msra.mxu0 0
    %1567 = vmatprep.subr.bf16.mxu0 0
    %1568 = vmatpush1.bf16.msra.mxu0 0
    %1569 = vmatprep.subr.bf16.mxu0 0
    %1570 = vmatpush1.bf16.msra.mxu0 0
    %1571 = vmatprep.subr.bf16.mxu0 0
    %1572 = vmatpush1.bf16.msra.mxu0 %v1553
    %1573 = vmatprep.subr.bf16.mxu0 0
    %1574 = vmatpush1.bf16.msra.mxu0 %v1552
    %1575 = vmatprep.subr.bf16.mxu0 0
    %1576 = vmatpush2.bf16.msra.mxu0 0
    %1577 = vmatprep.subr.bf16.mxu0 0
    %1578 = vmatpush2.bf16.msra.mxu0 0
    %1579 = vmatprep.subr.bf16.mxu0 0
    %1580 = vmatpush2.bf16.msra.mxu0 0
    %1581 = vmatprep.subr.bf16.mxu0 0
    %1582 = vmatpush2.bf16.msra.mxu0 0
    %1583 = vmatprep.subr.bf16.mxu0 0
    %1584 = vmatpush2.bf16.msra.mxu0 0
    %1585 = vmatprep.subr.bf16.mxu0 0
    %1586 = vmatpush2.bf16.msra.mxu0 0
    %1587 = vmatprep.subr.bf16.mxu0 0
    %1588 = vmatpush2.bf16.msra.mxu0 0
    %1589 = vmatprep.subr.bf16.mxu0 0
    %1590 = vmatpush2.bf16.msra.mxu0 0
    %1591 = vmatprep.mubr.bf16.mxu0 0
    %1592 = vmatmul.mubr.bf16.gmra.mxu0 %v1557
    %v1593 = vpop.f32.mrf.mxu0
    %v1594 = vadd.f32 0.0, %v1593
    %v1595 = vpop.f32.mrf.mxu0
    %v1596 = vpop.f32.mrf.mxu0
    %v1597 = vadd.f32 0.0, %v1596
    %v1598 = vpop.f32.mrf.mxu0
    %1599 = vdwg.mxu0
    %1600 = vst.msk [vmem:[#allocation12] sm:$0xff] %vm114, %v1594
    %1601 = vst.msk [vmem:[#allocation12 + $0x8] sm:$0xff] %vm114, %v1597
    // Predicated region
    $region42: #{tpu_custom_call.1} parent=1 // pred_check
      _
    $region43: #{tpu_custom_call.1} parent=1 // pred_check_branch
      %1603 = sbr.rel (0) target = $region45
    $region44: #{tpu_custom_call.1} parent=1 // pred_region
      %s1605 = ssub.s32 256, 256
      %1606 = vsyncadd [#allocation5], %s1605
      %s1607 = sshll.u32 [#allocation12], 4
      %s1608 = int_to_ptr.vmem [resolvable:$true] %s1607
      %1613 = dma.vmem_to_hbm [thread:$0]  %s1608, 256, %s5, [#allocation5], 128, 128, 8
    $region45: #{tpu_custom_call.1} parent=1 // pred_fallthru
      _
    // Predicated region
    $region46: #{tpu_custom_call.1} parent=1 // pred_check
      _
    $region47: #{tpu_custom_call.1} parent=1 // pred_check_branch
      %1615 = sbr.rel (0) target = $region49
    $region48: #{tpu_custom_call.1} parent=1 // pred_region
      %1616 = dma.done [#allocation5], 256
    $region49: #{tpu_custom_call.1} parent=1 // pred_fallthru
      _
    %1617 = vsyncpa [#allocation4], 1
    %1618 = vsyncpa [#allocation7], 1
    %1619 = vsyncpa [#allocation10], 1
    %1620 = vsyncpa [#allocation5], 1

</llo_original>
